<compile_context>
chip_gen: v7x
topology: tpu7x:2x2x1
jax: 0.10.0
libtpu: 0.0.40
codegen_flags: <defaults>
</compile_context>

<pallas_src>
import functools
import math

import jax
import jax.numpy as jnp
from jax.experimental import pallas as pl
from jax.experimental.pallas import tpu as pltpu

_LANE = 128


def _round_up(v, m):
    return ((v + m - 1) // m) * m


def _masked_layernorm(x, gamma, beta, n_valid, eps=1e-5):
    """LayerNorm over the first `n_valid` feature columns of a zero-padded x.

    Padded columns of x are guaranteed to be exactly zero (weights, biases,
    gamma and beta are zero-padded), so sums over the padded width equal sums
    over the valid width; the variance uses an explicit column mask.  Matches
    torch.nn.LayerNorm (biased variance, eps=1e-5) on the valid columns and
    returns exact zeros in the padded columns.
    """
    inv_n = 1.0 / float(n_valid)
    mu = jnp.sum(x, axis=-1, keepdims=True) * inv_n
    col = jax.lax.broadcasted_iota(jnp.int32, x.shape, x.ndim - 1)
    diff = jnp.where(col < n_valid, x - mu, 0.0)
    var = jnp.sum(diff * diff, axis=-1, keepdims=True) * inv_n
    return diff * jax.lax.rsqrt(var + eps) * gamma + beta


def affinity_kernel(a_ref, x_ref,
                    w1_ref, b1_ref, g1_ref, be1_ref,
                    w2_ref, b2_ref, g2_ref, be2_ref,
                    fw1_ref, fb1_ref, g3_ref, be3_ref,
                    fw3_ref, fb3_ref,
                    out_ref,
                    *, hidden_valid, mlp_valid):
    # Per-graph diagonal block of the normalized adjacency.  Stored in bf16 in
    # HBM (halves the dominant DMA traffic); upcast so the dots match the f32
    # reference bit-for-bit up to accumulation order.  At scale, keep bf16 on
    # both MXU operands for the full bf16-rate path.
    a = a_ref[0].astype(jnp.float32)                       # (n, n)
    x = x_ref[0]                                           # (n, Fin_pad)

    # --- GCNConv1: A_g @ (X_g @ W1) + b1, ReLU ---
    h = jnp.dot(x, w1_ref[...], preferred_element_type=jnp.float32)
    h = jnp.dot(a, h, preferred_element_type=jnp.float32) + b1_ref[...]
    h = jnp.maximum(h, 0.0)

    # --- gcn_bn LayerNorm (dropout = identity in eval) ---
    h = _masked_layernorm(h, g1_ref[...], be1_ref[...], hidden_valid)

    # --- GCNConv2 + ReLU ---
    h2 = jnp.dot(h, w2_ref[...], preferred_element_type=jnp.float32)
    h2 = jnp.dot(a, h2, preferred_element_type=jnp.float32) + b2_ref[...]
    h2 = jnp.maximum(h2, 0.0)

    # --- global_mean_pool over this graph's nodes ---
    pooled = jnp.mean(h2, axis=0, keepdims=True)           # (1, MLP_pad)

    # --- bn LN -> fc1 -> ReLU -> bn1 LN -> fc3 (tiny per-graph tail) ---
    z = _masked_layernorm(pooled, g2_ref[...], be2_ref[...], mlp_valid)
    z = jnp.dot(z, fw1_ref[...], preferred_element_type=jnp.float32) + fb1_ref[...]
    z = jnp.maximum(z, 0.0)
    z = _masked_layernorm(z, g3_ref[...], be3_ref[...], mlp_valid)
    z = jnp.dot(z, fw3_ref[...], preferred_element_type=jnp.float32) + fb3_ref[...]
    out_ref[...] = z.reshape(1, 1, 1)


@functools.partial(jax.jit, static_argnames=("hidden_valid", "mlp_valid"))
def affinity_net_forward(a_blocks, x_blocks, padded, *, hidden_valid, mlp_valid):
    G, n, _ = a_blocks.shape
    fin_p = x_blocks.shape[-1]
    h_p = padded["w1"].shape[1]
    o_p = padded["w2"].shape[1]
    m_p = padded["fw1"].shape[1]

    param_list = [
        padded["w1"], padded["b1"], padded["g1"], padded["be1"],
        padded["w2"], padded["b2"], padded["g2"], padded["be2"],
        padded["fw1"], padded["fb1"], padded["g3"], padded["be3"],
        padded["fw3"], padded["fb3"],
    ]

    kernel = functools.partial(
        affinity_kernel, hidden_valid=hidden_valid, mlp_valid=mlp_valid)

    in_specs = [
        # Per-graph diagonal adjacency block + node-feature block: one graph
        # per grid step, auto double-buffered so DMA overlaps the MXU work.
        pl.BlockSpec((1, n, n), lambda g: (g, 0, 0)),
        pl.BlockSpec((1, n, fin_p), lambda g: (g, 0, 0)),
    ] + [
        # Weights / norm params: full-extent blocks, constant index map ->
        # resident in VMEM across all grid steps (no per-step re-fetch).
        pl.BlockSpec(p.shape, lambda g: (0, 0)) for p in param_list
    ]
    out_spec = pl.BlockSpec((1, 1, 1), lambda g: (g, 0, 0))

    def nbytes(arr):
        return math.prod(arr.shape) * arr.dtype.itemsize

    # Explicit VMEM budget derived from the chosen block sizes (double-buffered
    # blocked operands + resident params + headroom), instead of relying on the
    # default scoped limit.
    blocked = 2 * (n * n * a_blocks.dtype.itemsize
                   + n * fin_p * x_blocks.dtype.itemsize
                   + 4)
    resident = sum(nbytes(p) for p in param_list)
    vmem_limit = int(max(blocked + resident + (4 << 20), 16 << 20))

    # Advisory cost estimate so XLA schedules the surrounding graph prep well.
    flops_per_graph = 2 * (n * fin_p * h_p + n * n * h_p
                           + n * h_p * o_p + n * n * o_p
                           + m_p * m_p + m_p)
    cost = pl.CostEstimate(
        flops=G * flops_per_graph,
        transcendentals=G * (2 * n + 2),
        bytes_accessed=nbytes(a_blocks) + nbytes(x_blocks) + resident + G * 4,
    )

    out = pl.pallas_call(
        kernel,
        out_shape=jax.ShapeDtypeStruct((G, 1, 1), jnp.float32),
        grid=(G,),
        in_specs=in_specs,
        out_specs=out_spec,
        compiler_params=pltpu.CompilerParams(
            dimension_semantics=("parallel",),   # graphs are independent
            vmem_limit_bytes=vmem_limit),
        cost_estimate=cost,
    )(a_blocks, x_blocks, *param_list)
    return out.reshape(G, 1)


def _make_params(key, in_channels, hidden_channels, out_channels, mlp_in_channels):
    ks = jax.random.split(key, 8)
    f32 = jnp.float32
    params = {
        "w1": 0.2 * jax.random.normal(ks[0], (in_channels, hidden_channels), f32),
        "b1": 0.1 * jax.random.normal(ks[1], (1, hidden_channels), f32),
        "g1": jnp.ones((1, hidden_channels), f32),
        "be1": jnp.zeros((1, hidden_channels), f32),
        "w2": 0.2 * jax.random.normal(ks[2], (hidden_channels, out_channels), f32),
        "b2": 0.1 * jax.random.normal(ks[3], (1, out_channels), f32),
        "g2": jnp.ones((1, mlp_in_channels), f32),
        "be2": jnp.zeros((1, mlp_in_channels), f32),
        "fw1": 0.2 * jax.random.normal(ks[4], (mlp_in_channels, mlp_in_channels), f32),
        "fb1": 0.1 * jax.random.normal(ks[5], (1, mlp_in_channels), f32),
        "g3": jnp.ones((1, mlp_in_channels), f32),
        "be3": jnp.zeros((1, mlp_in_channels), f32),
        "fw3": 0.2 * jax.random.normal(ks[6], (mlp_in_channels, 1), f32),
        "fb3": 0.1 * jax.random.normal(ks[7], (1, 1), f32),
    }
    # TODO(synk): `noise` parameter only affects the mode=True adversarial branch,
    # which is not exercised in the inference (mode=False) path implemented here.
    return params


def _pad_params(p, fin_p, h_p, o_p, m_p):
    """Zero-pad every parameter to lane-dense (multiple-of-128) feature dims."""
    def pad2(a, r, c):
        return jnp.pad(a, ((0, r - a.shape[0]), (0, c - a.shape[1])))
    return {
        "w1": pad2(p["w1"], fin_p, h_p),
        "b1": pad2(p["b1"], 1, h_p),
        "g1": pad2(p["g1"], 1, h_p),
        "be1": pad2(p["be1"], 1, h_p),
        "w2": pad2(p["w2"], h_p, o_p),
        "b2": pad2(p["b2"], 1, o_p),
        "g2": pad2(p["g2"], 1, m_p),
        "be2": pad2(p["be2"], 1, m_p),
        "fw1": pad2(p["fw1"], m_p, m_p),
        "fb1": pad2(p["fb1"], 1, m_p),
        "g3": pad2(p["g3"], 1, m_p),
        "be3": pad2(p["be3"], 1, m_p),
        "fw3": pad2(p["fw3"], m_p, 1),
        "fb3": p["fb3"],
    }


def _build_graph(num_graphs, nodes_per_graph):
    """Ring graph inside each sub-graph; returns dense D^-1/2 (A+I) D^-1/2."""
    N = num_graphs * nodes_per_graph
    rows, cols = [], []
    for g in range(num_graphs):
        base = g * nodes_per_graph
        for i in range(nodes_per_graph):
            a = base + i
            b = base + (i + 1) % nodes_per_graph
            rows += [a, b]
            cols += [b, a]
    adj = jnp.zeros((N, N), jnp.float32).at[jnp.array(rows), jnp.array(cols)].set(1.0)
    a_hat = adj + jnp.eye(N, dtype=jnp.float32)          # add self loops
    deg = jnp.sum(a_hat, axis=1)
    d_is = 1.0 / jnp.sqrt(deg)
    return d_is[:, None] * a_hat * d_is[None, :]


def _extract_diag_blocks(a_norm, num_graphs, nodes_per_graph):
    """[N,N] block-diagonal adjacency -> [G, n, n] per-graph diagonal blocks."""
    G, n = num_graphs, nodes_per_graph
    a4 = a_norm.reshape(G, n, G, n).transpose(0, 2, 1, 3)     # [G, G, n, n]
    diag = a4[jnp.arange(G), jnp.arange(G)]                    # [G, n, n]
    off_mass = jnp.sum(jnp.abs(a4)) - jnp.sum(jnp.abs(diag))   # cross-graph edge mass
    return diag, off_mass


def _layernorm_ref(x, gamma, beta, eps=1e-5):
    mu = jnp.mean(x, axis=-1, keepdims=True)
    var = jnp.mean((x - mu) ** 2, axis=-1, keepdims=True)
    return (x - mu) * jax.lax.rsqrt(var + eps) * gamma + beta


def _reference(a_blocks_bf16, x, p, num_graphs, nodes_per_graph):
    a = a_blocks_bf16.astype(jnp.float32)
    xg = x.reshape(num_graphs, nodes_per_graph, -1)
    h = jnp.einsum("gij,gjh->gih", a, xg @ p["w1"]) + p["b1"]
    h = _layernorm_ref(jnp.maximum(h, 0.0), p["g1"], p["be1"])
    h2 = jnp.einsum("gij,gjo->gio", a, h @ p["w2"]) + p["b2"]
    h2 = jnp.maximum(h2, 0.0)
    z = jnp.mean(h2, axis=1)
    z = _layernorm_ref(z, p["g2"], p["be2"])
    z = _layernorm_ref(jnp.maximum(z @ p["fw1"] + p["fb1"], 0.0), p["g3"], p["be3"])
    return z @ p["fw3"] + p["fb3"]


if __name__ == "__main__":
    # Small, forward-consistent shapes: 2 graphs x 8 nodes, in=4, hidden=32,
    # out_channels == mlp_in_channels == 32 (required by the module's forward).
    num_graphs, nodes_per_graph = 2, 8
    in_channels, hidden_channels = 4, 32
    out_channels = mlp_in_channels = 32

    fin_p = _round_up(in_channels, _LANE)
    h_p = _round_up(hidden_channels, _LANE)
    o_p = _round_up(out_channels, _LANE)
    m_p = _round_up(mlp_in_channels, _LANE)

    key = jax.random.PRNGKey(0)
    k_x, k_p = jax.random.split(key)

    a_norm = _build_graph(num_graphs, nodes_per_graph)
    a_blocks, off_mass = _extract_diag_blocks(a_norm, num_graphs, nodes_per_graph)
    # Per-graph tiling is only valid if A_norm is block-diagonal (no cross-graph edges).
    assert float(off_mass) == 0.0
    a_blocks_bf16 = a_blocks.astype(jnp.bfloat16)

    x = jax.random.normal(k_x, (num_graphs * nodes_per_graph, in_channels), jnp.float32)
    x_blocks = jnp.pad(
        x.reshape(num_graphs, nodes_per_graph, in_channels),
        ((0, 0), (0, 0), (0, fin_p - in_channels)))

    params = _make_params(k_p, in_channels, hidden_channels,
                          out_channels, mlp_in_channels)
    padded = _pad_params(params, fin_p, h_p, o_p, m_p)

    out = affinity_net_forward(a_blocks_bf16, x_blocks, padded,
                               hidden_valid=hidden_channels,
                               mlp_valid=mlp_in_channels)
    out = jax.block_until_ready(out)

    ref = _reference(a_blocks_bf16, x, params, num_graphs, nodes_per_graph)
    assert out.shape == (num_graphs, 1)
    assert jnp.allclose(out, ref, atol=1e-4, rtol=1e-4)

    print("KERNEL_OK")
</pallas_src>

<mosaic_0001>
module attributes {stable_mosaic.version = 11 : i64} {
  func.func @affinity_kernel(%arg0: i32, %arg1: memref<1x8x8xbf16, #tpu.memory_space<vmem>>, %arg2: memref<1x8x128xf32, #tpu.memory_space<vmem>>, %arg3: memref<128x128xf32, #tpu.memory_space<vmem>>, %arg4: memref<1x128xf32, #tpu.memory_space<vmem>>, %arg5: memref<1x128xf32, #tpu.memory_space<vmem>>, %arg6: memref<1x128xf32, #tpu.memory_space<vmem>>, %arg7: memref<128x128xf32, #tpu.memory_space<vmem>>, %arg8: memref<1x128xf32, #tpu.memory_space<vmem>>, %arg9: memref<1x128xf32, #tpu.memory_space<vmem>>, %arg10: memref<1x128xf32, #tpu.memory_space<vmem>>, %arg11: memref<128x128xf32, #tpu.memory_space<vmem>>, %arg12: memref<1x128xf32, #tpu.memory_space<vmem>>, %arg13: memref<1x128xf32, #tpu.memory_space<vmem>>, %arg14: memref<1x128xf32, #tpu.memory_space<vmem>>, %arg15: memref<128x1xf32, #tpu.memory_space<vmem>>, %arg16: memref<1x1xf32, #tpu.memory_space<vmem>>, %arg17: memref<1x1x1xf32, #tpu.memory_space<vmem>>) attributes {dimension_semantics = [#tpu.dimension_semantics<parallel>], iteration_bounds = array<i64: 2>, scalar_prefetch = 0 : i64, scratch_operands = 0 : i64, tpu.core_type = #tpu.core_type<tc>, window_params = [{transform_indices = @transform_0, window_bounds = array<i64: 1, 8, 8>}, {transform_indices = @transform_1, window_bounds = array<i64: 1, 8, 128>}, {pipeline_mode = #tpu.pipeline_mode<synchronous>, transform_indices = @transform_2, window_bounds = array<i64: 128, 128>}, {pipeline_mode = #tpu.pipeline_mode<synchronous>, transform_indices = @transform_3, window_bounds = array<i64: 1, 128>}, {pipeline_mode = #tpu.pipeline_mode<synchronous>, transform_indices = @transform_4, window_bounds = array<i64: 1, 128>}, {pipeline_mode = #tpu.pipeline_mode<synchronous>, transform_indices = @transform_5, window_bounds = array<i64: 1, 128>}, {pipeline_mode = #tpu.pipeline_mode<synchronous>, transform_indices = @transform_6, window_bounds = array<i64: 128, 128>}, {pipeline_mode = #tpu.pipeline_mode<synchronous>, transform_indices = @transform_7, window_bounds = array<i64: 1, 128>}, {pipeline_mode = #tpu.pipeline_mode<synchronous>, transform_indices = @transform_8, window_bounds = array<i64: 1, 128>}, {pipeline_mode = #tpu.pipeline_mode<synchronous>, transform_indices = @transform_9, window_bounds = array<i64: 1, 128>}, {pipeline_mode = #tpu.pipeline_mode<synchronous>, transform_indices = @transform_10, window_bounds = array<i64: 128, 128>}, {pipeline_mode = #tpu.pipeline_mode<synchronous>, transform_indices = @transform_11, window_bounds = array<i64: 1, 128>}, {pipeline_mode = #tpu.pipeline_mode<synchronous>, transform_indices = @transform_12, window_bounds = array<i64: 1, 128>}, {pipeline_mode = #tpu.pipeline_mode<synchronous>, transform_indices = @transform_13, window_bounds = array<i64: 1, 128>}, {pipeline_mode = #tpu.pipeline_mode<synchronous>, transform_indices = @transform_14, window_bounds = array<i64: 128, 1>}, {pipeline_mode = #tpu.pipeline_mode<synchronous>, transform_indices = @transform_15, window_bounds = array<i64: 1, 1>}, {transform_indices = @transform_16, window_bounds = array<i64: 1, 1, 1>}]} {
    %c0 = arith.constant 0 : index
    %c0_0 = arith.constant 0 : index
    %c0_1 = arith.constant 0 : index
    %0 = vector.load %arg1[%c0, %c0_0, %c0_1] : memref<1x8x8xbf16, #tpu.memory_space<vmem>>, vector<1x8x8xbf16>
    %1 = vector.shape_cast %0 : vector<1x8x8xbf16> to vector<8x8xbf16>
    %2 = arith.extf %1 : vector<8x8xbf16> to vector<8x8xf32>
    %c0_2 = arith.constant 0 : index
    %c0_3 = arith.constant 0 : index
    %c0_4 = arith.constant 0 : index
    %3 = vector.load %arg2[%c0_2, %c0_3, %c0_4] : memref<1x8x128xf32, #tpu.memory_space<vmem>>, vector<1x8x128xf32>
    %4 = vector.shape_cast %3 : vector<1x8x128xf32> to vector<8x128xf32>
    %c0_5 = arith.constant 0 : index
    %c0_6 = arith.constant 0 : index
    %5 = vector.load %arg3[%c0_5, %c0_6] : memref<128x128xf32, #tpu.memory_space<vmem>>, vector<128x128xf32>
    %cst = arith.constant dense<0.000000e+00> : vector<8x128xf32>
    %6 = tpu.matmul %4, %5, %cst {dimension_numbers = #tpu.dot_dimension_numbers<[1], [0], [0], [1], [0, 0, 1, 1], [], []>} : vector<8x128xf32>, vector<128x128xf32>, vector<8x128xf32> -> vector<8x128xf32>
    %cst_7 = arith.constant dense<0.000000e+00> : vector<8x128xf32>
    %7 = tpu.matmul %2, %6, %cst_7 {dimension_numbers = #tpu.dot_dimension_numbers<[1], [0], [0], [1], [0, 0, 1, 1], [], []>} : vector<8x8xf32>, vector<8x128xf32>, vector<8x128xf32> -> vector<8x128xf32>
    %c0_8 = arith.constant 0 : index
    %c0_9 = arith.constant 0 : index
    %8 = vector.load %arg4[%c0_8, %c0_9] : memref<1x128xf32, #tpu.memory_space<vmem>>, vector<1x128xf32>
    %9 = vector.broadcast %8 : vector<1x128xf32> to vector<8x128xf32>
    %10 = arith.addf %7, %9 : vector<8x128xf32>
    %cst_10 = arith.constant 0.000000e+00 : f32
    %11 = vector.broadcast %cst_10 : f32 to vector<8x128xf32>
    %12 = arith.maximumf %10, %11 : vector<8x128xf32>
    %c0_11 = arith.constant 0 : index
    %c0_12 = arith.constant 0 : index
    %13 = vector.load %arg5[%c0_11, %c0_12] : memref<1x128xf32, #tpu.memory_space<vmem>>, vector<1x128xf32>
    %c0_13 = arith.constant 0 : index
    %c0_14 = arith.constant 0 : index
    %14 = vector.load %arg6[%c0_13, %c0_14] : memref<1x128xf32, #tpu.memory_space<vmem>>, vector<1x128xf32>
    %cst_15 = arith.constant dense<0.000000e+00> : vector<8xf32>
    %15 = vector.multi_reduction <add>, %12, %cst_15 [1] : vector<8x128xf32> to vector<8xf32>
    %16 = vector.shape_cast %15 : vector<8xf32> to vector<8x1xf32>
    %cst_16 = arith.constant 3.125000e-02 : f32
    %17 = vector.broadcast %cst_16 : f32 to vector<8x1xf32>
    %18 = arith.mulf %16, %17 : vector<8x1xf32>
    %19 = tpu.iota {dimensions = array<i32: 1>} : vector<8x128xi32>
    %c32_i32 = arith.constant 32 : i32
    %20 = vector.broadcast %c32_i32 : i32 to vector<8x128xi32>
    %21 = arith.cmpi slt, %19, %20 : vector<8x128xi32>
    %22 = vector.broadcast %18 : vector<8x1xf32> to vector<8x128xf32>
    %23 = arith.subf %12, %22 : vector<8x128xf32>
    %cst_17 = arith.constant 0.000000e+00 : f32
    %24 = vector.broadcast %cst_17 : f32 to vector<8x128xf32>
    %25 = arith.select %21, %23, %24 : vector<8x128xi1>, vector<8x128xf32>
    %26 = arith.mulf %25, %25 : vector<8x128xf32>
    %cst_18 = arith.constant dense<0.000000e+00> : vector<8xf32>
    %27 = vector.multi_reduction <add>, %26, %cst_18 [1] : vector<8x128xf32> to vector<8xf32>
    %28 = vector.shape_cast %27 : vector<8xf32> to vector<8x1xf32>
    %cst_19 = arith.constant 3.125000e-02 : f32
    %29 = vector.broadcast %cst_19 : f32 to vector<8x1xf32>
    %30 = arith.mulf %28, %29 : vector<8x1xf32>
    %cst_20 = arith.constant 9.99999974E-6 : f32
    %31 = vector.broadcast %cst_20 : f32 to vector<8x1xf32>
    %32 = arith.addf %30, %31 : vector<8x1xf32>
    %33 = math.rsqrt %32 : vector<8x1xf32>
    %34 = vector.broadcast %33 : vector<8x1xf32> to vector<8x128xf32>
    %35 = arith.mulf %25, %34 : vector<8x128xf32>
    %36 = vector.broadcast %13 : vector<1x128xf32> to vector<8x128xf32>
    %37 = arith.mulf %35, %36 : vector<8x128xf32>
    %38 = vector.broadcast %14 : vector<1x128xf32> to vector<8x128xf32>
    %39 = arith.addf %37, %38 : vector<8x128xf32>
    %c0_21 = arith.constant 0 : index
    %c0_22 = arith.constant 0 : index
    %40 = vector.load %arg7[%c0_21, %c0_22] : memref<128x128xf32, #tpu.memory_space<vmem>>, vector<128x128xf32>
    %cst_23 = arith.constant dense<0.000000e+00> : vector<8x128xf32>
    %41 = tpu.matmul %39, %40, %cst_23 {dimension_numbers = #tpu.dot_dimension_numbers<[1], [0], [0], [1], [0, 0, 1, 1], [], []>} : vector<8x128xf32>, vector<128x128xf32>, vector<8x128xf32> -> vector<8x128xf32>
    %cst_24 = arith.constant dense<0.000000e+00> : vector<8x128xf32>
    %42 = tpu.matmul %2, %41, %cst_24 {dimension_numbers = #tpu.dot_dimension_numbers<[1], [0], [0], [1], [0, 0, 1, 1], [], []>} : vector<8x8xf32>, vector<8x128xf32>, vector<8x128xf32> -> vector<8x128xf32>
    %c0_25 = arith.constant 0 : index
    %c0_26 = arith.constant 0 : index
    %43 = vector.load %arg8[%c0_25, %c0_26] : memref<1x128xf32, #tpu.memory_space<vmem>>, vector<1x128xf32>
    %44 = vector.broadcast %43 : vector<1x128xf32> to vector<8x128xf32>
    %45 = arith.addf %42, %44 : vector<8x128xf32>
    %cst_27 = arith.constant 0.000000e+00 : f32
    %46 = vector.broadcast %cst_27 : f32 to vector<8x128xf32>
    %47 = arith.maximumf %45, %46 : vector<8x128xf32>
    %cst_28 = arith.constant dense<0.000000e+00> : vector<128xf32>
    %48 = vector.multi_reduction <add>, %47, %cst_28 [0] : vector<8x128xf32> to vector<128xf32>
    %49 = vector.shape_cast %48 : vector<128xf32> to vector<1x128xf32>
    %cst_29 = arith.constant 8.000000e+00 : f32
    %50 = vector.broadcast %cst_29 : f32 to vector<1x128xf32>
    %51 = arith.divf %49, %50 : vector<1x128xf32>
    %c0_30 = arith.constant 0 : index
    %c0_31 = arith.constant 0 : index
    %52 = vector.load %arg9[%c0_30, %c0_31] : memref<1x128xf32, #tpu.memory_space<vmem>>, vector<1x128xf32>
    %c0_32 = arith.constant 0 : index
    %c0_33 = arith.constant 0 : index
    %53 = vector.load %arg10[%c0_32, %c0_33] : memref<1x128xf32, #tpu.memory_space<vmem>>, vector<1x128xf32>
    %cst_34 = arith.constant dense<0.000000e+00> : vector<1xf32>
    %54 = vector.multi_reduction <add>, %51, %cst_34 [1] : vector<1x128xf32> to vector<1xf32>
    %55 = vector.shape_cast %54 : vector<1xf32> to vector<1x1xf32>
    %cst_35 = arith.constant 3.125000e-02 : f32
    %56 = vector.broadcast %cst_35 : f32 to vector<1x1xf32>
    %57 = arith.mulf %55, %56 : vector<1x1xf32>
    %58 = tpu.iota {dimensions = array<i32: 1>} : vector<1x128xi32>
    %c32_i32_36 = arith.constant 32 : i32
    %59 = vector.broadcast %c32_i32_36 : i32 to vector<1x128xi32>
    %60 = arith.cmpi slt, %58, %59 : vector<1x128xi32>
    %61 = vector.broadcast %57 : vector<1x1xf32> to vector<1x128xf32>
    %62 = arith.subf %51, %61 : vector<1x128xf32>
    %cst_37 = arith.constant 0.000000e+00 : f32
    %63 = vector.broadcast %cst_37 : f32 to vector<1x128xf32>
    %64 = arith.select %60, %62, %63 : vector<1x128xi1>, vector<1x128xf32>
    %65 = arith.mulf %64, %64 : vector<1x128xf32>
    %cst_38 = arith.constant dense<0.000000e+00> : vector<1xf32>
    %66 = vector.multi_reduction <add>, %65, %cst_38 [1] : vector<1x128xf32> to vector<1xf32>
    %67 = vector.shape_cast %66 : vector<1xf32> to vector<1x1xf32>
    %cst_39 = arith.constant 3.125000e-02 : f32
    %68 = vector.broadcast %cst_39 : f32 to vector<1x1xf32>
    %69 = arith.mulf %67, %68 : vector<1x1xf32>
    %cst_40 = arith.constant 9.99999974E-6 : f32
    %70 = vector.broadcast %cst_40 : f32 to vector<1x1xf32>
    %71 = arith.addf %69, %70 : vector<1x1xf32>
    %72 = math.rsqrt %71 : vector<1x1xf32>
    %73 = vector.broadcast %72 : vector<1x1xf32> to vector<1x128xf32>
    %74 = arith.mulf %64, %73 : vector<1x128xf32>
    %75 = arith.mulf %74, %52 : vector<1x128xf32>
    %76 = arith.addf %75, %53 : vector<1x128xf32>
    %c0_41 = arith.constant 0 : index
    %c0_42 = arith.constant 0 : index
    %77 = vector.load %arg11[%c0_41, %c0_42] : memref<128x128xf32, #tpu.memory_space<vmem>>, vector<128x128xf32>
    %cst_43 = arith.constant dense<0.000000e+00> : vector<1x128xf32>
    %78 = tpu.matmul %76, %77, %cst_43 {dimension_numbers = #tpu.dot_dimension_numbers<[1], [0], [0], [1], [0, 0, 1, 1], [], []>} : vector<1x128xf32>, vector<128x128xf32>, vector<1x128xf32> -> vector<1x128xf32>
    %c0_44 = arith.constant 0 : index
    %c0_45 = arith.constant 0 : index
    %79 = vector.load %arg12[%c0_44, %c0_45] : memref<1x128xf32, #tpu.memory_space<vmem>>, vector<1x128xf32>
    %80 = arith.addf %78, %79 : vector<1x128xf32>
    %cst_46 = arith.constant 0.000000e+00 : f32
    %81 = vector.broadcast %cst_46 : f32 to vector<1x128xf32>
    %82 = arith.maximumf %80, %81 : vector<1x128xf32>
    %c0_47 = arith.constant 0 : index
    %c0_48 = arith.constant 0 : index
    %83 = vector.load %arg13[%c0_47, %c0_48] : memref<1x128xf32, #tpu.memory_space<vmem>>, vector<1x128xf32>
    %c0_49 = arith.constant 0 : index
    %c0_50 = arith.constant 0 : index
    %84 = vector.load %arg14[%c0_49, %c0_50] : memref<1x128xf32, #tpu.memory_space<vmem>>, vector<1x128xf32>
    %cst_51 = arith.constant dense<0.000000e+00> : vector<1xf32>
    %85 = vector.multi_reduction <add>, %82, %cst_51 [1] : vector<1x128xf32> to vector<1xf32>
    %86 = vector.shape_cast %85 : vector<1xf32> to vector<1x1xf32>
    %cst_52 = arith.constant 3.125000e-02 : f32
    %87 = vector.broadcast %cst_52 : f32 to vector<1x1xf32>
    %88 = arith.mulf %86, %87 : vector<1x1xf32>
    %89 = tpu.iota {dimensions = array<i32: 1>} : vector<1x128xi32>
    %c32_i32_53 = arith.constant 32 : i32
    %90 = vector.broadcast %c32_i32_53 : i32 to vector<1x128xi32>
    %91 = arith.cmpi slt, %89, %90 : vector<1x128xi32>
    %92 = vector.broadcast %88 : vector<1x1xf32> to vector<1x128xf32>
    %93 = arith.subf %82, %92 : vector<1x128xf32>
    %cst_54 = arith.constant 0.000000e+00 : f32
    %94 = vector.broadcast %cst_54 : f32 to vector<1x128xf32>
    %95 = arith.select %91, %93, %94 : vector<1x128xi1>, vector<1x128xf32>
    %96 = arith.mulf %95, %95 : vector<1x128xf32>
    %cst_55 = arith.constant dense<0.000000e+00> : vector<1xf32>
    %97 = vector.multi_reduction <add>, %96, %cst_55 [1] : vector<1x128xf32> to vector<1xf32>
    %98 = vector.shape_cast %97 : vector<1xf32> to vector<1x1xf32>
    %cst_56 = arith.constant 3.125000e-02 : f32
    %99 = vector.broadcast %cst_56 : f32 to vector<1x1xf32>
    %100 = arith.mulf %98, %99 : vector<1x1xf32>
    %cst_57 = arith.constant 9.99999974E-6 : f32
    %101 = vector.broadcast %cst_57 : f32 to vector<1x1xf32>
    %102 = arith.addf %100, %101 : vector<1x1xf32>
    %103 = math.rsqrt %102 : vector<1x1xf32>
    %104 = vector.broadcast %103 : vector<1x1xf32> to vector<1x128xf32>
    %105 = arith.mulf %95, %104 : vector<1x128xf32>
    %106 = arith.mulf %105, %83 : vector<1x128xf32>
    %107 = arith.addf %106, %84 : vector<1x128xf32>
    %c0_58 = arith.constant 0 : index
    %c0_59 = arith.constant 0 : index
    %108 = vector.load %arg15[%c0_58, %c0_59] : memref<128x1xf32, #tpu.memory_space<vmem>>, vector<128x1xf32>
    %cst_60 = arith.constant dense<0.000000e+00> : vector<1x1xf32>
    %109 = tpu.matmul %107, %108, %cst_60 {dimension_numbers = #tpu.dot_dimension_numbers<[1], [0], [0], [1], [0, 0, 1, 1], [], []>} : vector<1x128xf32>, vector<128x1xf32>, vector<1x1xf32> -> vector<1x1xf32>
    %c0_61 = arith.constant 0 : index
    %c0_62 = arith.constant 0 : index
    %110 = vector.load %arg16[%c0_61, %c0_62] : memref<1x1xf32, #tpu.memory_space<vmem>>, vector<1x1xf32>
    %111 = arith.addf %109, %110 : vector<1x1xf32>
    %112 = vector.shape_cast %111 : vector<1x1xf32> to vector<1x1x1xf32>
    %c0_63 = arith.constant 0 : index
    %c0_64 = arith.constant 0 : index
    %c0_65 = arith.constant 0 : index
    %113 = vector.load %arg17[%c0_63, %c0_64, %c0_65] : memref<1x1x1xf32, #tpu.memory_space<vmem>>, vector<1x1x1xf32>
    tpu.vector_store %arg17[%c0_63, %c0_64, %c0_65], %112 {strides = array<i32>} : memref<1x1x1xf32, #tpu.memory_space<vmem>>, vector<1x1x1xf32>,
    return
  }
  func.func @transform_0(%arg0: i32) -> (i32, i32, i32) {
    %c0_i32 = arith.constant 0 : i32
    %c0_i32_0 = arith.constant 0 : i32
    %c0_i32_1 = arith.constant 0 : i32
    return %arg0, %c0_i32, %c0_i32_0 : i32, i32, i32
  }
  func.func @transform_1(%arg0: i32) -> (i32, i32, i32) {
    %c0_i32 = arith.constant 0 : i32
    %c0_i32_0 = arith.constant 0 : i32
    %c0_i32_1 = arith.constant 0 : i32
    return %arg0, %c0_i32, %c0_i32_0 : i32, i32, i32
  }
  func.func @transform_2(%arg0: i32) -> (i32, i32) {
    %c0_i32 = arith.constant 0 : i32
    %c0_i32_0 = arith.constant 0 : i32
    %c0_i32_1 = arith.constant 0 : i32
    return %c0_i32, %c0_i32_0 : i32, i32
  }
  func.func @transform_3(%arg0: i32) -> (i32, i32) {
    %c0_i32 = arith.constant 0 : i32
    %c0_i32_0 = arith.constant 0 : i32
    %c0_i32_1 = arith.constant 0 : i32
    return %c0_i32, %c0_i32_0 : i32, i32
  }
  func.func @transform_4(%arg0: i32) -> (i32, i32) {
    %c0_i32 = arith.constant 0 : i32
    %c0_i32_0 = arith.constant 0 : i32
    %c0_i32_1 = arith.constant 0 : i32
    return %c0_i32, %c0_i32_0 : i32, i32
  }
  func.func @transform_5(%arg0: i32) -> (i32, i32) {
    %c0_i32 = arith.constant 0 : i32
    %c0_i32_0 = arith.constant 0 : i32
    %c0_i32_1 = arith.constant 0 : i32
    return %c0_i32, %c0_i32_0 : i32, i32
  }
  func.func @transform_6(%arg0: i32) -> (i32, i32) {
    %c0_i32 = arith.constant 0 : i32
    %c0_i32_0 = arith.constant 0 : i32
    %c0_i32_1 = arith.constant 0 : i32
    return %c0_i32, %c0_i32_0 : i32, i32
  }
  func.func @transform_7(%arg0: i32) -> (i32, i32) {
    %c0_i32 = arith.constant 0 : i32
    %c0_i32_0 = arith.constant 0 : i32
    %c0_i32_1 = arith.constant 0 : i32
    return %c0_i32, %c0_i32_0 : i32, i32
  }
  func.func @transform_8(%arg0: i32) -> (i32, i32) {
    %c0_i32 = arith.constant 0 : i32
    %c0_i32_0 = arith.constant 0 : i32
    %c0_i32_1 = arith.constant 0 : i32
    return %c0_i32, %c0_i32_0 : i32, i32
  }
  func.func @transform_9(%arg0: i32) -> (i32, i32) {
    %c0_i32 = arith.constant 0 : i32
    %c0_i32_0 = arith.constant 0 : i32
    %c0_i32_1 = arith.constant 0 : i32
    return %c0_i32, %c0_i32_0 : i32, i32
  }
  func.func @transform_10(%arg0: i32) -> (i32, i32) {
    %c0_i32 = arith.constant 0 : i32
    %c0_i32_0 = arith.constant 0 : i32
    %c0_i32_1 = arith.constant 0 : i32
    return %c0_i32, %c0_i32_0 : i32, i32
  }
  func.func @transform_11(%arg0: i32) -> (i32, i32) {
    %c0_i32 = arith.constant 0 : i32
    %c0_i32_0 = arith.constant 0 : i32
    %c0_i32_1 = arith.constant 0 : i32
    return %c0_i32, %c0_i32_0 : i32, i32
  }
  func.func @transform_12(%arg0: i32) -> (i32, i32) {
    %c0_i32 = arith.constant 0 : i32
    %c0_i32_0 = arith.constant 0 : i32
    %c0_i32_1 = arith.constant 0 : i32
    return %c0_i32, %c0_i32_0 : i32, i32
  }
  func.func @transform_13(%arg0: i32) -> (i32, i32) {
    %c0_i32 = arith.constant 0 : i32
    %c0_i32_0 = arith.constant 0 : i32
    %c0_i32_1 = arith.constant 0 : i32
    return %c0_i32, %c0_i32_0 : i32, i32
  }
  func.func @transform_14(%arg0: i32) -> (i32, i32) {
    %c0_i32 = arith.constant 0 : i32
    %c0_i32_0 = arith.constant 0 : i32
    %c0_i32_1 = arith.constant 0 : i32
    return %c0_i32, %c0_i32_0 : i32, i32
  }
  func.func @transform_15(%arg0: i32) -> (i32, i32) {
    %c0_i32 = arith.constant 0 : i32
    %c0_i32_0 = arith.constant 0 : i32
    %c0_i32_1 = arith.constant 0 : i32
    return %c0_i32, %c0_i32_0 : i32, i32
  }
  func.func @transform_16(%arg0: i32) -> (i32, i32, i32) {
    %c0_i32 = arith.constant 0 : i32
    %c0_i32_0 = arith.constant 0 : i32
    %c0_i32_1 = arith.constant 0 : i32
    return %arg0, %c0_i32, %c0_i32_0 : i32, i32, i32
  }
}

</mosaic_0001>

<llo_original>
// kernel: affinity_net_forward.1
$region0: #{affinity_net_forward.1}
  #allocation0 [shape = 'u32[]', space=smem, size = 0x4, offset = 0x4, fixed_abs, tag = 'smem constant byte address 0x4 - core index']
  #allocation1 [shape = 'u32[144,128]{1,0:T(1,128)}', space=vmem, size = 0x12000, scoped, tag = 'internal scratch']
  #allocation2 [shape = 'f32[1,1]{1,0:T(1,128)S(1)}', space=vmem, size = 0x200, scoped, tag = 'scoped memory for affinity_net_forward.1']
  %s0 = inlined_call_operand.vmem [shape: bf16[2,8,8], index: 0, kind: input, shape index: {}]
  %s1 = inlined_call_operand.vmem [shape: f32[2,8,128], index: 1, kind: input, shape index: {}]
  %s2 = inlined_call_operand.vmem [shape: f32[128,128], index: 2, kind: input, shape index: {}]
  %s3 = inlined_call_operand.vmem [shape: f32[1,128], index: 3, kind: input, shape index: {}]
  %s4 = inlined_call_operand.vmem [shape: f32[1,128], index: 4, kind: input, shape index: {}]
  %s5 = inlined_call_operand.vmem [shape: f32[1,128], index: 5, kind: input, shape index: {}]
  %s6 = inlined_call_operand.hbm [shape: f32[128,128], index: 6, kind: input, shape index: {}]
  %s7 = inlined_call_operand.vmem [shape: f32[1,128], index: 7, kind: input, shape index: {}]
  %s8 = inlined_call_operand.vmem [shape: f32[1,128], index: 8, kind: input, shape index: {}]
  %s9 = inlined_call_operand.vmem [shape: f32[1,128], index: 9, kind: input, shape index: {}]
  %s10 = inlined_call_operand.hbm [shape: f32[128,128], index: 10, kind: input, shape index: {}]
  %s11 = inlined_call_operand.vmem [shape: f32[1,128], index: 11, kind: input, shape index: {}]
  %s12 = inlined_call_operand.vmem [shape: f32[1,128], index: 12, kind: input, shape index: {}]
  %s13 = inlined_call_operand.vmem [shape: f32[1,128], index: 13, kind: input, shape index: {}]
  %s14 = inlined_call_operand.vmem [shape: f32[128,1], index: 14, kind: input, shape index: {}]
  %s15 = inlined_call_operand.<no memory space> [shape: f32[1,1], index: 15, kind: input, shape index: {}]
  %s16 = inlined_call_operand.vmem [shape: f32[2,1,1], index: 16, kind: output, shape index: {}]
  %s17 = sld [smem:[#allocation0]]
  $region105: #{affinity_net_forward.1} parent=0
    _
  %s19 = ssub.s32 1, %s17
  %s20 = scalar_select 0, %s19, %s17
  %v21 = vstv %s15
  %22 = vst [vmem:[#allocation2] sm:$0x1] %v21
  $region1: #{affinity_net_forward.1} parent=0
    #allocation3 [shape = 'u8[65536]{0}', space=vmem, size = 0x10000, scoped, tag = 'input window, operand 6, single buffered']
    #allocation4 [shape = 's32[2]{0}', space=sflag, size = 0x8, scoped, tag = 'scoped memory for affinity_net_forward.1']
    #allocation5 [shape = 'u8[65536]{0}', space=vmem, size = 0x10000, scoped, tag = 'input window, operand 10, single buffered']
    #allocation6 [shape = 's32[1]{0}', space=sflag, size = 0x4, scoped, tag = 'scoped memory for affinity_net_forward.1']
    %23 = vsyncpa [#allocation4], 0
    %24 = vsyncpa [#allocation6], 0
    loop: start=0, step=1, limit=4
    $region2: #{affinity_net_forward.1} parent=1 // loop_pre_header
      _
    $region3: #{affinity_net_forward.1} parent=1 // loop_header
      %s26 = sphi 0, %s30
      %p27 = scmp.ge.s32.totalorder %s26, 4
      %s36 = sphi 0, %s38
      %s39 = sphi 0, %s36
      %s40 = sphi 0, %s39
      %s56 = sphi 0, %s40
      %s62 = sphi 0, %s64
      %s65 = sphi 0, %s62
      %s66 = sphi 0, %s65
      %s82 = sphi 0, %s66
      %s86 = sphi 0, %s86
      %s88 = sphi 0, %s86
      %s89 = sphi 0, %s88
      %s103 = sphi 0, %s89
      %s107 = sphi 0, %s107
      %s109 = sphi 0, %s107
      %s110 = sphi 0, %s109
      %s124 = sphi 0, %s110
      %s128 = sphi 0, %s128
      %s130 = sphi 0, %s128
      %s131 = sphi 0, %s130
      %s145 = sphi 0, %s131
      %s149 = sphi 0, %s149
      %s151 = sphi 0, %s149
      %s152 = sphi 0, %s151
      %s166 = sphi 0, %s152
      %s170 = sphi 0, %s170
      %s172 = sphi 0, %s170
      %s173 = sphi 0, %s172
      %s187 = sphi 0, %s173
      %s191 = sphi 0, %s191
      %s193 = sphi 0, %s191
      %s194 = sphi 0, %s193
      %s208 = sphi 0, %s194
      %s212 = sphi 0, %s212
      %s214 = sphi 0, %s212
      %s215 = sphi 0, %s214
      %s229 = sphi 0, %s215
      %s233 = sphi 0, %s233
      %s235 = sphi 0, %s233
      %s236 = sphi 0, %s235
      %s250 = sphi 0, %s236
      %s254 = sphi 0, %s254
      %s256 = sphi 0, %s254
      %s257 = sphi 0, %s256
      %s271 = sphi 0, %s257
      %s275 = sphi 0, %s275
      %s277 = sphi 0, %s275
      %s278 = sphi 0, %s277
      %s292 = sphi 0, %s278
      %s296 = sphi 0, %s296
      %s298 = sphi 0, %s296
      %s299 = sphi 0, %s298
      %s313 = sphi 0, %s299
      %s317 = sphi 0, %s317
      %s319 = sphi 0, %s317
      %s320 = sphi 0, %s319
      %s334 = sphi 0, %s320
      %s338 = sphi 0, %s338
      %s340 = sphi 0, %s338
      %s341 = sphi 0, %s340
      %s355 = sphi 0, %s341
      %s359 = sphi 0, %s359
      %s361 = sphi 0, %s359
      %s362 = sphi 0, %s361
      %s376 = sphi 0, %s362
      %s382 = sphi 0, %s384
      %s385 = sphi 0, %s382
      %s386 = sphi 0, %s385
      %s402 = sphi 0, %s386
    $region4: #{affinity_net_forward.1} parent=1 // loop_header_branch
      %29 = sbr.rel (%p27) target = $region8
    $region5: #{affinity_net_forward.1} parent=1 // loop_body
      %s31 = ssub.s32 %s26, 1
      %s32 = ssub.s32 %s26, 2
      %s33 = sadd.s32 %s26, 1
      %s34 = ssub.s32 %s26, %s33
      %p35 = scmp.eq.s32.totalorder %s34, 0
      %s37 = sadd.s32 %s36, 1
      %s38 = scalar_select %p35, %s36, %s37
      %p41 = pneg %p35
      %p42 = scmp.eq.s32.totalorder %s26, 1
      %p43 = por %p41, %p42
      %p44 = scmp.ne.s32.totalorder %s36, %s39
      %p45 = scmp.eq.s32.totalorder %s26, 0
      %p46 = por %p44, %p45
      %p47 = scmp.ne.s32.totalorder %s36, %s39
      %p48 = scmp.eq.s32.totalorder %s31, 1
      %p49 = por %p47, %p48
      %p50 = scmp.ne.s32.totalorder %s39, %s40
      %p51 = scmp.eq.s32.totalorder %s31, 0
      %p52 = por %p50, %p51
      %p53 = scmp.ne.s32.totalorder %s39, %s40
      %p54 = scmp.eq.s32.totalorder %s32, 1
      %p55 = por %p53, %p54
      %p57 = scmp.ne.s32.totalorder %s40, %s56
      %p58 = scmp.eq.s32.totalorder %s32, 0
      %p59 = por %p57, %p58
      %s60 = ssub.s32 %s26, %s33
      %p61 = scmp.eq.s32.totalorder %s60, 0
      %s63 = sadd.s32 %s62, 1
      %s64 = scalar_select %p61, %s62, %s63
      %p67 = pneg %p61
      %p68 = scmp.eq.s32.totalorder %s26, 1
      %p69 = por %p67, %p68
      %p70 = scmp.ne.s32.totalorder %s62, %s65
      %p71 = scmp.eq.s32.totalorder %s26, 0
      %p72 = por %p70, %p71
      %p73 = scmp.ne.s32.totalorder %s62, %s65
      %p74 = scmp.eq.s32.totalorder %s31, 1
      %p75 = por %p73, %p74
      %p76 = scmp.ne.s32.totalorder %s65, %s66
      %p77 = scmp.eq.s32.totalorder %s31, 0
      %p78 = por %p76, %p77
      %p79 = scmp.ne.s32.totalorder %s65, %s66
      %p80 = scmp.eq.s32.totalorder %s32, 1
      %p81 = por %p79, %p80
      %p83 = scmp.ne.s32.totalorder %s66, %s82
      %p84 = scmp.eq.s32.totalorder %s32, 0
      %p85 = por %p83, %p84
      %s87 = sadd.s32 %s86, 1
      %p90 = scmp.eq.s32.totalorder %s26, 1
      %p91 = scmp.ne.s32.totalorder %s86, %s88
      %p92 = scmp.eq.s32.totalorder %s26, 0
      %p93 = por %p91, %p92
      %p94 = scmp.ne.s32.totalorder %s86, %s88
      %p95 = scmp.eq.s32.totalorder %s31, 1
      %p96 = por %p94, %p95
      %p97 = scmp.ne.s32.totalorder %s88, %s89
      %p98 = scmp.eq.s32.totalorder %s31, 0
      %p99 = por %p97, %p98
      %p100 = scmp.ne.s32.totalorder %s88, %s89
      %p101 = scmp.eq.s32.totalorder %s32, 1
      %p102 = por %p100, %p101
      %p104 = scmp.ne.s32.totalorder %s89, %s103
      %p105 = scmp.eq.s32.totalorder %s32, 0
      %p106 = por %p104, %p105
      %s108 = sadd.s32 %s107, 1
      %p111 = scmp.eq.s32.totalorder %s26, 1
      %p112 = scmp.ne.s32.totalorder %s107, %s109
      %p113 = scmp.eq.s32.totalorder %s26, 0
      %p114 = por %p112, %p113
      %p115 = scmp.ne.s32.totalorder %s107, %s109
      %p116 = scmp.eq.s32.totalorder %s31, 1
      %p117 = por %p115, %p116
      %p118 = scmp.ne.s32.totalorder %s109, %s110
      %p119 = scmp.eq.s32.totalorder %s31, 0
      %p120 = por %p118, %p119
      %p121 = scmp.ne.s32.totalorder %s109, %s110
      %p122 = scmp.eq.s32.totalorder %s32, 1
      %p123 = por %p121, %p122
      %p125 = scmp.ne.s32.totalorder %s110, %s124
      %p126 = scmp.eq.s32.totalorder %s32, 0
      %p127 = por %p125, %p126
      %s129 = sadd.s32 %s128, 1
      %p132 = scmp.eq.s32.totalorder %s26, 1
      %p133 = scmp.ne.s32.totalorder %s128, %s130
      %p134 = scmp.eq.s32.totalorder %s26, 0
      %p135 = por %p133, %p134
      %p136 = scmp.ne.s32.totalorder %s128, %s130
      %p137 = scmp.eq.s32.totalorder %s31, 1
      %p138 = por %p136, %p137
      %p139 = scmp.ne.s32.totalorder %s130, %s131
      %p140 = scmp.eq.s32.totalorder %s31, 0
      %p141 = por %p139, %p140
      %p142 = scmp.ne.s32.totalorder %s130, %s131
      %p143 = scmp.eq.s32.totalorder %s32, 1
      %p144 = por %p142, %p143
      %p146 = scmp.ne.s32.totalorder %s131, %s145
      %p147 = scmp.eq.s32.totalorder %s32, 0
      %p148 = por %p146, %p147
      %s150 = sadd.s32 %s149, 1
      %p153 = scmp.eq.s32.totalorder %s26, 1
      %p154 = scmp.ne.s32.totalorder %s149, %s151
      %p155 = scmp.eq.s32.totalorder %s26, 0
      %p156 = por %p154, %p155
      %p157 = scmp.ne.s32.totalorder %s149, %s151
      %p158 = scmp.eq.s32.totalorder %s31, 1
      %p159 = por %p157, %p158
      %p160 = scmp.ne.s32.totalorder %s151, %s152
      %p161 = scmp.eq.s32.totalorder %s31, 0
      %p162 = por %p160, %p161
      %p163 = scmp.ne.s32.totalorder %s151, %s152
      %p164 = scmp.eq.s32.totalorder %s32, 1
      %p165 = por %p163, %p164
      %p167 = scmp.ne.s32.totalorder %s152, %s166
      %p168 = scmp.eq.s32.totalorder %s32, 0
      %p169 = por %p167, %p168
      %s171 = sadd.s32 %s170, 1
      %p174 = scmp.eq.s32.totalorder %s26, 1
      %p175 = scmp.ne.s32.totalorder %s170, %s172
      %p176 = scmp.eq.s32.totalorder %s26, 0
      %p177 = por %p175, %p176
      %p178 = scmp.ne.s32.totalorder %s170, %s172
      %p179 = scmp.eq.s32.totalorder %s31, 1
      %p180 = por %p178, %p179
      %p181 = scmp.ne.s32.totalorder %s172, %s173
      %p182 = scmp.eq.s32.totalorder %s31, 0
      %p183 = por %p181, %p182
      %p184 = scmp.ne.s32.totalorder %s172, %s173
      %p185 = scmp.eq.s32.totalorder %s32, 1
      %p186 = por %p184, %p185
      %p188 = scmp.ne.s32.totalorder %s173, %s187
      %p189 = scmp.eq.s32.totalorder %s32, 0
      %p190 = por %p188, %p189
      %s192 = sadd.s32 %s191, 1
      %p195 = scmp.eq.s32.totalorder %s26, 1
      %p196 = scmp.ne.s32.totalorder %s191, %s193
      %p197 = scmp.eq.s32.totalorder %s26, 0
      %p198 = por %p196, %p197
      %p199 = scmp.ne.s32.totalorder %s191, %s193
      %p200 = scmp.eq.s32.totalorder %s31, 1
      %p201 = por %p199, %p200
      %p202 = scmp.ne.s32.totalorder %s193, %s194
      %p203 = scmp.eq.s32.totalorder %s31, 0
      %p204 = por %p202, %p203
      %p205 = scmp.ne.s32.totalorder %s193, %s194
      %p206 = scmp.eq.s32.totalorder %s32, 1
      %p207 = por %p205, %p206
      %p209 = scmp.ne.s32.totalorder %s194, %s208
      %p210 = scmp.eq.s32.totalorder %s32, 0
      %p211 = por %p209, %p210
      %s213 = sadd.s32 %s212, 1
      %p216 = scmp.eq.s32.totalorder %s26, 1
      %p217 = scmp.ne.s32.totalorder %s212, %s214
      %p218 = scmp.eq.s32.totalorder %s26, 0
      %p219 = por %p217, %p218
      %p220 = scmp.ne.s32.totalorder %s212, %s214
      %p221 = scmp.eq.s32.totalorder %s31, 1
      %p222 = por %p220, %p221
      %p223 = scmp.ne.s32.totalorder %s214, %s215
      %p224 = scmp.eq.s32.totalorder %s31, 0
      %p225 = por %p223, %p224
      %p226 = scmp.ne.s32.totalorder %s214, %s215
      %p227 = scmp.eq.s32.totalorder %s32, 1
      %p228 = por %p226, %p227
      %p230 = scmp.ne.s32.totalorder %s215, %s229
      %p231 = scmp.eq.s32.totalorder %s32, 0
      %p232 = por %p230, %p231
      %s234 = sadd.s32 %s233, 1
      %p237 = scmp.eq.s32.totalorder %s26, 1
      %p238 = scmp.ne.s32.totalorder %s233, %s235
      %p239 = scmp.eq.s32.totalorder %s26, 0
      %p240 = por %p238, %p239
      %p241 = scmp.ne.s32.totalorder %s233, %s235
      %p242 = scmp.eq.s32.totalorder %s31, 1
      %p243 = por %p241, %p242
      %p244 = scmp.ne.s32.totalorder %s235, %s236
      %p245 = scmp.eq.s32.totalorder %s31, 0
      %p246 = por %p244, %p245
      %p247 = scmp.ne.s32.totalorder %s235, %s236
      %p248 = scmp.eq.s32.totalorder %s32, 1
      %p249 = por %p247, %p248
      %p251 = scmp.ne.s32.totalorder %s236, %s250
      %p252 = scmp.eq.s32.totalorder %s32, 0
      %p253 = por %p251, %p252
      %s255 = sadd.s32 %s254, 1
      %p258 = scmp.eq.s32.totalorder %s26, 1
      %p259 = scmp.ne.s32.totalorder %s254, %s256
      %p260 = scmp.eq.s32.totalorder %s26, 0
      %p261 = por %p259, %p260
      %p262 = scmp.ne.s32.totalorder %s254, %s256
      %p263 = scmp.eq.s32.totalorder %s31, 1
      %p264 = por %p262, %p263
      %p265 = scmp.ne.s32.totalorder %s256, %s257
      %p266 = scmp.eq.s32.totalorder %s31, 0
      %p267 = por %p265, %p266
      %p268 = scmp.ne.s32.totalorder %s256, %s257
      %p269 = scmp.eq.s32.totalorder %s32, 1
      %p270 = por %p268, %p269
      %p272 = scmp.ne.s32.totalorder %s257, %s271
      %p273 = scmp.eq.s32.totalorder %s32, 0
      %p274 = por %p272, %p273
      %s276 = sadd.s32 %s275, 1
      %p279 = scmp.eq.s32.totalorder %s26, 1
      %p280 = scmp.ne.s32.totalorder %s275, %s277
      %p281 = scmp.eq.s32.totalorder %s26, 0
      %p282 = por %p280, %p281
      %p283 = scmp.ne.s32.totalorder %s275, %s277
      %p284 = scmp.eq.s32.totalorder %s31, 1
      %p285 = por %p283, %p284
      %p286 = scmp.ne.s32.totalorder %s277, %s278
      %p287 = scmp.eq.s32.totalorder %s31, 0
      %p288 = por %p286, %p287
      %p289 = scmp.ne.s32.totalorder %s277, %s278
      %p290 = scmp.eq.s32.totalorder %s32, 1
      %p291 = por %p289, %p290
      %p293 = scmp.ne.s32.totalorder %s278, %s292
      %p294 = scmp.eq.s32.totalorder %s32, 0
      %p295 = por %p293, %p294
      %s297 = sadd.s32 %s296, 1
      %p300 = scmp.eq.s32.totalorder %s26, 1
      %p301 = scmp.ne.s32.totalorder %s296, %s298
      %p302 = scmp.eq.s32.totalorder %s26, 0
      %p303 = por %p301, %p302
      %p304 = scmp.ne.s32.totalorder %s296, %s298
      %p305 = scmp.eq.s32.totalorder %s31, 1
      %p306 = por %p304, %p305
      %p307 = scmp.ne.s32.totalorder %s298, %s299
      %p308 = scmp.eq.s32.totalorder %s31, 0
      %p309 = por %p307, %p308
      %p310 = scmp.ne.s32.totalorder %s298, %s299
      %p311 = scmp.eq.s32.totalorder %s32, 1
      %p312 = por %p310, %p311
      %p314 = scmp.ne.s32.totalorder %s299, %s313
      %p315 = scmp.eq.s32.totalorder %s32, 0
      %p316 = por %p314, %p315
      %s318 = sadd.s32 %s317, 1
      %p321 = scmp.eq.s32.totalorder %s26, 1
      %p322 = scmp.ne.s32.totalorder %s317, %s319
      %p323 = scmp.eq.s32.totalorder %s26, 0
      %p324 = por %p322, %p323
      %p325 = scmp.ne.s32.totalorder %s317, %s319
      %p326 = scmp.eq.s32.totalorder %s31, 1
      %p327 = por %p325, %p326
      %p328 = scmp.ne.s32.totalorder %s319, %s320
      %p329 = scmp.eq.s32.totalorder %s31, 0
      %p330 = por %p328, %p329
      %p331 = scmp.ne.s32.totalorder %s319, %s320
      %p332 = scmp.eq.s32.totalorder %s32, 1
      %p333 = por %p331, %p332
      %p335 = scmp.ne.s32.totalorder %s320, %s334
      %p336 = scmp.eq.s32.totalorder %s32, 0
      %p337 = por %p335, %p336
      %s339 = sadd.s32 %s338, 1
      %p342 = scmp.eq.s32.totalorder %s26, 1
      %p343 = scmp.ne.s32.totalorder %s338, %s340
      %p344 = scmp.eq.s32.totalorder %s26, 0
      %p345 = por %p343, %p344
      %p346 = scmp.ne.s32.totalorder %s338, %s340
      %p347 = scmp.eq.s32.totalorder %s31, 1
      %p348 = por %p346, %p347
      %p349 = scmp.ne.s32.totalorder %s340, %s341
      %p350 = scmp.eq.s32.totalorder %s31, 0
      %p351 = por %p349, %p350
      %p352 = scmp.ne.s32.totalorder %s340, %s341
      %p353 = scmp.eq.s32.totalorder %s32, 1
      %p354 = por %p352, %p353
      %p356 = scmp.ne.s32.totalorder %s341, %s355
      %p357 = scmp.eq.s32.totalorder %s32, 0
      %p358 = por %p356, %p357
      %s360 = sadd.s32 %s359, 1
      %p363 = scmp.eq.s32.totalorder %s26, 1
      %p364 = scmp.ne.s32.totalorder %s359, %s361
      %p365 = scmp.eq.s32.totalorder %s26, 0
      %p366 = por %p364, %p365
      %p367 = scmp.ne.s32.totalorder %s359, %s361
      %p368 = scmp.eq.s32.totalorder %s31, 1
      %p369 = por %p367, %p368
      %p370 = scmp.ne.s32.totalorder %s361, %s362
      %p371 = scmp.eq.s32.totalorder %s31, 0
      %p372 = por %p370, %p371
      %p373 = scmp.ne.s32.totalorder %s361, %s362
      %p374 = scmp.eq.s32.totalorder %s32, 1
      %p375 = por %p373, %p374
      %p377 = scmp.ne.s32.totalorder %s362, %s376
      %p378 = scmp.eq.s32.totalorder %s32, 0
      %p379 = por %p377, %p378
      %s380 = ssub.s32 %s26, %s33
      %p381 = scmp.eq.s32.totalorder %s380, 0
      %s383 = sadd.s32 %s382, 1
      %s384 = scalar_select %p381, %s382, %s383
      %p387 = pneg %p381
      %p388 = scmp.eq.s32.totalorder %s26, 1
      %p389 = por %p387, %p388
      %p390 = scmp.ne.s32.totalorder %s382, %s385
      %p391 = scmp.eq.s32.totalorder %s26, 0
      %p392 = por %p390, %p391
      %p393 = scmp.ne.s32.totalorder %s382, %s385
      %p394 = scmp.eq.s32.totalorder %s31, 1
      %p395 = por %p393, %p394
      %p396 = scmp.ne.s32.totalorder %s385, %s386
      %p397 = scmp.eq.s32.totalorder %s31, 0
      %p398 = por %p396, %p397
      %p399 = scmp.ne.s32.totalorder %s385, %s386
      %p400 = scmp.eq.s32.totalorder %s32, 1
      %p401 = por %p399, %p400
      %p403 = scmp.ne.s32.totalorder %s386, %s402
      %p404 = scmp.eq.s32.totalorder %s32, 0
      %p405 = por %p403, %p404
      %p406 = scmp.le.s32.totalorder 1, %s26
      %p407 = scmp.lt.s32.totalorder %s26, 3
      %p408 = pnand %p406, %p407
      %p409 = pneg %p408
      // Predicated region
      $region9: #{affinity_net_forward.1} parent=5 // pred_check
        _
      $region10: #{affinity_net_forward.1} parent=5 // pred_check_branch
        %411 = sbr.rel (%p408) target = $region12
      $region11: #{affinity_net_forward.1} parent=5 // pred_region
        %s412 = ssub.s32 %s26, 1
        // Predicated region
        $region13: #{affinity_net_forward.1} parent=11 // pred_check
          %p413 = pneg %p99
        $region14: #{affinity_net_forward.1} parent=11 // pred_check_branch
          %415 = sbr.rel (%p413) target = $region16
        $region15: #{affinity_net_forward.1} parent=11 // pred_region
          _
        $region16: #{affinity_net_forward.1} parent=11 // pred_fallthru
          _
        // Predicated region
        $region17: #{affinity_net_forward.1} parent=11 // pred_check
          %p416 = pneg %p120
        $region18: #{affinity_net_forward.1} parent=11 // pred_check_branch
          %418 = sbr.rel (%p416) target = $region20
        $region19: #{affinity_net_forward.1} parent=11 // pred_region
          _
        $region20: #{affinity_net_forward.1} parent=11 // pred_fallthru
          _
        // Predicated region
        $region21: #{affinity_net_forward.1} parent=11 // pred_check
          %p419 = pneg %p141
        $region22: #{affinity_net_forward.1} parent=11 // pred_check_branch
          %421 = sbr.rel (%p419) target = $region24
        $region23: #{affinity_net_forward.1} parent=11 // pred_region
          _
        $region24: #{affinity_net_forward.1} parent=11 // pred_fallthru
          _
        // Predicated region
        $region25: #{affinity_net_forward.1} parent=11 // pred_check
          %p422 = pneg %p162
        $region26: #{affinity_net_forward.1} parent=11 // pred_check_branch
          %424 = sbr.rel (%p422) target = $region28
        $region27: #{affinity_net_forward.1} parent=11 // pred_region
          _
        $region28: #{affinity_net_forward.1} parent=11 // pred_fallthru
          _
        // Predicated region
        $region29: #{affinity_net_forward.1} parent=11 // pred_check
          %p425 = pneg %p183
        $region30: #{affinity_net_forward.1} parent=11 // pred_check_branch
          %427 = sbr.rel (%p425) target = $region32
        $region31: #{affinity_net_forward.1} parent=11 // pred_region
          %s429 = ssub.s32 2048, 2048
          %430 = vsyncadd [#allocation4], %s429
          %s431 = sshll.u32 [#allocation3], 4
          %s432 = int_to_ptr.vmem [resolvable:$true] %s431
          %437 = dma.hbm_to_vmem [thread:$0]  %s6, 2048, %s432, [#allocation4], 128, 128, 8
        $region32: #{affinity_net_forward.1} parent=11 // pred_fallthru
          _
        // Predicated region
        $region33: #{affinity_net_forward.1} parent=11 // pred_check
          %p438 = pneg %p204
        $region34: #{affinity_net_forward.1} parent=11 // pred_check_branch
          %440 = sbr.rel (%p438) target = $region36
        $region35: #{affinity_net_forward.1} parent=11 // pred_region
          _
        $region36: #{affinity_net_forward.1} parent=11 // pred_fallthru
          _
        // Predicated region
        $region37: #{affinity_net_forward.1} parent=11 // pred_check
          %p441 = pneg %p225
        $region38: #{affinity_net_forward.1} parent=11 // pred_check_branch
          %443 = sbr.rel (%p441) target = $region40
        $region39: #{affinity_net_forward.1} parent=11 // pred_region
          _
        $region40: #{affinity_net_forward.1} parent=11 // pred_fallthru
          _
        // Predicated region
        $region41: #{affinity_net_forward.1} parent=11 // pred_check
          %p444 = pneg %p246
        $region42: #{affinity_net_forward.1} parent=11 // pred_check_branch
          %446 = sbr.rel (%p444) target = $region44
        $region43: #{affinity_net_forward.1} parent=11 // pred_region
          _
        $region44: #{affinity_net_forward.1} parent=11 // pred_fallthru
          _
        // Predicated region
        $region45: #{affinity_net_forward.1} parent=11 // pred_check
          %p447 = pneg %p267
        $region46: #{affinity_net_forward.1} parent=11 // pred_check_branch
          %449 = sbr.rel (%p447) target = $region48
        $region47: #{affinity_net_forward.1} parent=11 // pred_region
          %s451 = ssub.s32 2048, 2048
          %452 = vsyncadd [#allocation6], %s451
          %s453 = sshll.u32 [#allocation5], 4
          %s454 = int_to_ptr.vmem [resolvable:$true] %s453
          %459 = dma.hbm_to_vmem [thread:$0]  %s10, 2048, %s454, [#allocation6], 128, 128, 8
        $region48: #{affinity_net_forward.1} parent=11 // pred_fallthru
          _
        // Predicated region
        $region49: #{affinity_net_forward.1} parent=11 // pred_check
          %p460 = pneg %p288
        $region50: #{affinity_net_forward.1} parent=11 // pred_check_branch
          %462 = sbr.rel (%p460) target = $region52
        $region51: #{affinity_net_forward.1} parent=11 // pred_region
          _
        $region52: #{affinity_net_forward.1} parent=11 // pred_fallthru
          _
        // Predicated region
        $region53: #{affinity_net_forward.1} parent=11 // pred_check
          %p463 = pneg %p309
        $region54: #{affinity_net_forward.1} parent=11 // pred_check_branch
          %465 = sbr.rel (%p463) target = $region56
        $region55: #{affinity_net_forward.1} parent=11 // pred_region
          _
        $region56: #{affinity_net_forward.1} parent=11 // pred_fallthru
          _
        // Predicated region
        $region57: #{affinity_net_forward.1} parent=11 // pred_check
          %p466 = pneg %p330
        $region58: #{affinity_net_forward.1} parent=11 // pred_check_branch
          %468 = sbr.rel (%p466) target = $region60
        $region59: #{affinity_net_forward.1} parent=11 // pred_region
          _
        $region60: #{affinity_net_forward.1} parent=11 // pred_fallthru
          _
        // Predicated region
        $region61: #{affinity_net_forward.1} parent=11 // pred_check
          %p469 = pneg %p351
        $region62: #{affinity_net_forward.1} parent=11 // pred_check_branch
          %471 = sbr.rel (%p469) target = $region64
        $region63: #{affinity_net_forward.1} parent=11 // pred_region
          _
        $region64: #{affinity_net_forward.1} parent=11 // pred_fallthru
          _
        // Predicated region
        $region65: #{affinity_net_forward.1} parent=11 // pred_check
          %p472 = pneg %p372
        $region66: #{affinity_net_forward.1} parent=11 // pred_check_branch
          %474 = sbr.rel (%p472) target = $region68
        $region67: #{affinity_net_forward.1} parent=11 // pred_region
          _
        $region68: #{affinity_net_forward.1} parent=11 // pred_fallthru
          _
      $region12: #{affinity_net_forward.1} parent=5 // pred_fallthru
        _
      %p475 = scmp.lt.s32.totalorder %s26, 2
      // Predicated region
      $region69: #{affinity_net_forward.1} parent=5 // pred_check
        %p476 = pneg %p475
      $region70: #{affinity_net_forward.1} parent=5 // pred_check_branch
        %478 = sbr.rel (%p476) target = $region72
      $region71: #{affinity_net_forward.1} parent=5 // pred_region
        // Predicated region
        $region73: #{affinity_net_forward.1} parent=71 // pred_check
          %p479 = pneg %p46
        $region74: #{affinity_net_forward.1} parent=71 // pred_check_branch
          %481 = sbr.rel (%p479) target = $region76
        $region75: #{affinity_net_forward.1} parent=71 // pred_region
          %p482 = scmp.lt.s32.totalorder %s26, 1
          %s483 = scalar_select %p482, %s26, 1
          %s484 = smul.addr %s483, 4
          %s485 = scalar_lea.vmem %s0, %s484
        $region76: #{affinity_net_forward.1} parent=71 // pred_fallthru
          _
        // Predicated region
        $region77: #{affinity_net_forward.1} parent=71 // pred_check
          %p486 = pneg %p72
        $region78: #{affinity_net_forward.1} parent=71 // pred_check_branch
          %488 = sbr.rel (%p486) target = $region80
        $region79: #{affinity_net_forward.1} parent=71 // pred_region
          %p489 = scmp.lt.s32.totalorder %s26, 1
          %s490 = scalar_select %p489, %s26, 1
          %s491 = smul.addr %s490, 8
          %s492 = scalar_lea.vmem %s1, %s491
        $region80: #{affinity_net_forward.1} parent=71 // pred_fallthru
          _
      $region72: #{affinity_net_forward.1} parent=5 // pred_fallthru
        _
      %p493 = scmp.le.s32.totalorder 1, %s26
      %p494 = scmp.lt.s32.totalorder %s26, 3
      %p495 = pnand %p493, %p494
      %p496 = pneg %p495
      // Predicated region
      $region81: #{affinity_net_forward.1} parent=5 // pred_check
        _
      $region82: #{affinity_net_forward.1} parent=5 // pred_check_branch
        %498 = sbr.rel (%p495) target = $region84
      $region83: #{affinity_net_forward.1} parent=5 // pred_region
        %s499 = ssub.s32 %s26, 1
        // Predicated region
        $region85: #{affinity_net_forward.1} parent=83 // pred_check
          %p500 = pneg %p183
        $region86: #{affinity_net_forward.1} parent=83 // pred_check_branch
          %502 = sbr.rel (%p500) target = $region88
        $region87: #{affinity_net_forward.1} parent=83 // pred_region
          %503 = dma.done [#allocation4], 2048
        $region88: #{affinity_net_forward.1} parent=83 // pred_fallthru
          _
        // Predicated region
        $region89: #{affinity_net_forward.1} parent=83 // pred_check
          %p504 = pneg %p267
        $region90: #{affinity_net_forward.1} parent=83 // pred_check_branch
          %506 = sbr.rel (%p504) target = $region92
        $region91: #{affinity_net_forward.1} parent=83 // pred_region
          %507 = dma.done [#allocation6], 2048
        $region92: #{affinity_net_forward.1} parent=83 // pred_fallthru
          _
        %p508 = scmp.lt.s32.totalorder %s31, 1
        %s509 = scalar_select %p508, %s31, 1
        %s510 = smul.addr %s509, 4
        %s511 = scalar_lea.vmem %s0, %s510
        %p512 = pneg %p52
        %p513 = pneg %p49
        %p514 = scmp.lt.s32.totalorder %s31, 1
        %s515 = scalar_select %p514, %s31, 1
        %s516 = smul.addr %s515, 8
        %s517 = scalar_lea.vmem %s1, %s516
        %p518 = pneg %p78
        %p519 = pneg %p75
        %p520 = pneg %p99
        %p521 = pneg %p96
        %p522 = pneg %p120
        %p523 = pneg %p117
        %p524 = pneg %p141
        %p525 = pneg %p138
        %p526 = pneg %p162
        %p527 = pneg %p159
        %p528 = pneg %p183
        %p529 = pneg %p180
        %p530 = pneg %p204
        %p531 = pneg %p201
        %p532 = pneg %p225
        %p533 = pneg %p222
        %p534 = pneg %p246
        %p535 = pneg %p243
        %p536 = pneg %p267
        %p537 = pneg %p264
        %p538 = pneg %p288
        %p539 = pneg %p285
        %p540 = pneg %p309
        %p541 = pneg %p306
        %p542 = pneg %p330
        %p543 = pneg %p327
        %p544 = pneg %p351
        %p545 = pneg %p348
        %p546 = pneg %p372
        %p547 = pneg %p369
        %p548 = pneg %p398
        %p549 = pneg %p395
        %p550 = scmp.lt.s32.totalorder %s31, 1
        %s551 = scalar_select %p550, %s31, 1
        %s552 = scalar_lea.vmem %s16, %s551
        %p553 = scmp.lt.s32.totalorder %s31, 1
        %s554 = scalar_select %p553, %s31, 1
        %s555 = smul.addr %s554, 4
        %s556 = scalar_lea.vmem %s0, %s555
        %p557 = scmp.lt.s32.totalorder %s31, 1
        %s558 = scalar_select %p557, %s31, 1
        %s559 = smul.addr %s558, 8
        %s560 = scalar_lea.vmem %s1, %s559
        %p561 = scmp.lt.s32.totalorder %s31, 1
        %s562 = scalar_select %p561, %s31, 1
        %s563 = scalar_lea.vmem %s16, %s562
        %v564 = vld [vmem:[%s556] sm:$0xf]
        %v565 = vunpack.c.l.bf16 %v564
        %v566 = vld [vmem:[%s560] sm:$0xff]
        %v567 = vld [vmem:[%s2] sm:$0xff]
        %v568 = vld [vmem:[%s2 + $0x8] sm:$0xff]
        %v569 = vld [vmem:[%s2 + $0x10] sm:$0xff]
        %v570 = vld [vmem:[%s2 + $0x18] sm:$0xff]
        %v571 = vld [vmem:[%s2 + $0x20] sm:$0xff]
        %v572 = vld [vmem:[%s2 + $0x28] sm:$0xff]
        %v573 = vld [vmem:[%s2 + $0x30] sm:$0xff]
        %v574 = vld [vmem:[%s2 + $0x38] sm:$0xff]
        %v575 = vld [vmem:[%s2 + $0x40] sm:$0xff]
        %v576 = vld [vmem:[%s2 + $0x48] sm:$0xff]
        %v577 = vld [vmem:[%s2 + $0x50] sm:$0xff]
        %v578 = vld [vmem:[%s2 + $0x58] sm:$0xff]
        %v579 = vld [vmem:[%s2 + $0x60] sm:$0xff]
        %v580 = vld [vmem:[%s2 + $0x68] sm:$0xff]
        %v581 = vld [vmem:[%s2 + $0x70] sm:$0xff]
        %v582 = vld [vmem:[%s2 + $0x78] sm:$0xff]
        %583 = vmatprep.subr.mxu0 0.0
        %584 = vmatpush1.msra.mxu0 %v567
        %585 = vmatprep.subr.mxu0 0.0
        %586 = vmatpush1.msra.mxu0 %v568
        %587 = vmatprep.subr.mxu0 0.0
        %588 = vmatpush1.msra.mxu0 %v569
        %589 = vmatprep.subr.mxu0 0.0
        %590 = vmatpush1.msra.mxu0 %v570
        %591 = vmatprep.subr.mxu0 0.0
        %592 = vmatpush1.msra.mxu0 %v571
        %593 = vmatprep.subr.mxu0 0.0
        %594 = vmatpush1.msra.mxu0 %v572
        %595 = vmatprep.subr.mxu0 0.0
        %596 = vmatpush1.msra.mxu0 %v573
        %597 = vmatprep.subr.mxu0 0.0
        %598 = vmatpush1.msra.mxu0 %v574
        %599 = vmatprep.subr.mxu0 0.0
        %600 = vmatpush1.msra.mxu0 %v575
        %601 = vmatprep.subr.mxu0 0.0
        %602 = vmatpush1.msra.mxu0 %v576
        %603 = vmatprep.subr.mxu0 0.0
        %604 = vmatpush1.msra.mxu0 %v577
        %605 = vmatprep.subr.mxu0 0.0
        %606 = vmatpush1.msra.mxu0 %v578
        %607 = vmatprep.subr.mxu0 0.0
        %608 = vmatpush1.msra.mxu0 %v579
        %609 = vmatprep.subr.mxu0 0.0
        %610 = vmatpush1.msra.mxu0 %v580
        %611 = vmatprep.subr.mxu0 0.0
        %612 = vmatpush1.msra.mxu0 %v581
        %613 = vmatprep.subr.mxu0 0.0
        %614 = vmatpush1.msra.mxu0 %v582
        %615 = vmatprep.subr.mxu0 0.0
        %616 = vmatpush1.msra.mxu0 0.0
        %617 = vmatprep.subr.mxu0 0.0
        %618 = vmatpush1.msra.mxu0 0.0
        %619 = vmatprep.subr.mxu0 0.0
        %620 = vmatpush1.msra.mxu0 0.0
        %621 = vmatprep.subr.mxu0 0.0
        %622 = vmatpush1.msra.mxu0 0.0
        %623 = vmatprep.subr.mxu0 0.0
        %624 = vmatpush1.msra.mxu0 0.0
        %625 = vmatprep.subr.mxu0 0.0
        %626 = vmatpush1.msra.mxu0 0.0
        %627 = vmatprep.subr.mxu0 0.0
        %628 = vmatpush1.msra.mxu0 0.0
        %629 = vmatprep.subr.mxu0 0.0
        %630 = vmatpush1.msra.mxu0 0.0
        %631 = vmatprep.subr.mxu0 0.0
        %632 = vmatpush1.msra.mxu0 0.0
        %633 = vmatprep.subr.mxu0 0.0
        %634 = vmatpush1.msra.mxu0 0.0
        %635 = vmatprep.subr.mxu0 0.0
        %636 = vmatpush1.msra.mxu0 0.0
        %637 = vmatprep.subr.mxu0 0.0
        %638 = vmatpush1.msra.mxu0 0.0
        %639 = vmatprep.subr.mxu0 0.0
        %640 = vmatpush1.msra.mxu0 0.0
        %641 = vmatprep.subr.mxu0 0.0
        %642 = vmatpush1.msra.mxu0 0.0
        %643 = vmatprep.subr.mxu0 0.0
        %644 = vmatpush1.msra.mxu0 0.0
        %645 = vmatprep.subr.mxu0 0.0
        %646 = vmatpush1.msra.mxu0 0.0
        %647 = vmatprep.mubr.f32.mxu0 0.0
        %648 = vmatmul.mubr.f32.gmra.mrb[0].mxu0 %v566
        %v649 = vpop.f32.mrb[0].mxu0
        %v650 = vadd.f32 0.0, %v649
        %v651 = vpop.f32.mrb[0].mxu0
        %652 = vdwg.mxu0
        %v653 = vld [vmem:[%s3] sm:$0x1]
        %v655 = vlaneseq
        %v656 = vshrl.u32 %v655, 7
        %v657 = vsub.s32 0, %v656
        %v658 = vrot.slane %v653, %v657
        %vm660 = vcmask 64512
        %v662 = vsel %vm660, %v565, 0
        %664 = vmatprep.subr.mxu0 0.0
        %665 = vmatpush1.msra.mxu0 %v650
        %666 = vmatprep.subr.mxu0 0.0
        %667 = vmatpush1.msra.mxu0 0.0
        %668 = vmatprep.subr.mxu0 0.0
        %669 = vmatpush1.msra.mxu0 0.0
        %670 = vmatprep.subr.mxu0 0.0
        %671 = vmatpush1.msra.mxu0 0.0
        %672 = vmatprep.subr.mxu0 0.0
        %673 = vmatpush1.msra.mxu0 0.0
        %674 = vmatprep.subr.mxu0 0.0
        %675 = vmatpush1.msra.mxu0 0.0
        %676 = vmatprep.subr.mxu0 0.0
        %677 = vmatpush1.msra.mxu0 0.0
        %678 = vmatprep.subr.mxu0 0.0
        %679 = vmatpush1.msra.mxu0 0.0
        %680 = vmatprep.subr.mxu0 0.0
        %681 = vmatpush1.msra.mxu0 0.0
        %682 = vmatprep.subr.mxu0 0.0
        %683 = vmatpush1.msra.mxu0 0.0
        %684 = vmatprep.subr.mxu0 0.0
        %685 = vmatpush1.msra.mxu0 0.0
        %686 = vmatprep.subr.mxu0 0.0
        %687 = vmatpush1.msra.mxu0 0.0
        %688 = vmatprep.subr.mxu0 0.0
        %689 = vmatpush1.msra.mxu0 0.0
        %690 = vmatprep.subr.mxu0 0.0
        %691 = vmatpush1.msra.mxu0 0.0
        %692 = vmatprep.subr.mxu0 0.0
        %693 = vmatpush1.msra.mxu0 0.0
        %694 = vmatprep.subr.mxu0 0.0
        %695 = vmatpush1.msra.mxu0 0.0
        %696 = vmatprep.subr.mxu0 0.0
        %697 = vmatpush1.msra.mxu0 0.0
        %698 = vmatprep.subr.mxu0 0.0
        %699 = vmatpush1.msra.mxu0 0.0
        %700 = vmatprep.subr.mxu0 0.0
        %701 = vmatpush1.msra.mxu0 0.0
        %702 = vmatprep.subr.mxu0 0.0
        %703 = vmatpush1.msra.mxu0 0.0
        %704 = vmatprep.subr.mxu0 0.0
        %705 = vmatpush1.msra.mxu0 0.0
        %706 = vmatprep.subr.mxu0 0.0
        %707 = vmatpush1.msra.mxu0 0.0
        %708 = vmatprep.subr.mxu0 0.0
        %709 = vmatpush1.msra.mxu0 0.0
        %710 = vmatprep.subr.mxu0 0.0
        %711 = vmatpush1.msra.mxu0 0.0
        %712 = vmatprep.subr.mxu0 0.0
        %713 = vmatpush1.msra.mxu0 0.0
        %714 = vmatprep.subr.mxu0 0.0
        %715 = vmatpush1.msra.mxu0 0.0
        %716 = vmatprep.subr.mxu0 0.0
        %717 = vmatpush1.msra.mxu0 0.0
        %718 = vmatprep.subr.mxu0 0.0
        %719 = vmatpush1.msra.mxu0 0.0
        %720 = vmatprep.subr.mxu0 0.0
        %721 = vmatpush1.msra.mxu0 0.0
        %722 = vmatprep.subr.mxu0 0.0
        %723 = vmatpush1.msra.mxu0 0.0
        %724 = vmatprep.subr.mxu0 0.0
        %725 = vmatpush1.msra.mxu0 0.0
        %726 = vmatprep.subr.mxu0 0.0
        %727 = vmatpush1.msra.mxu0 0.0
        %728 = vmatprep.mubr.f32.mxu0 0.0
        %729 = vmatmul.mubr.f32.gmra.mrb[0].mxu0 %v662
        %v730 = vpop.f32.mrb[0].mxu0
        %v731 = vadd.f32 %v658, %v730
        %v732 = vpop.f32.mrb[0].mxu0
        %733 = vdwg.mxu0
        %v734 = vmax.f32 %v731, 0.0
        %v735 = vld [vmem:[%s4] sm:$0x1]
        %v736 = vld [vmem:[%s5] sm:$0x1]
        %737 = vadd.xlane.f32.xlu0 %v734
        %v738 = vpop.xlane.xlu0 %737
        %v739 = vmul.f32 %v738, 0.03125
        %v740 = vlaneseq
        %v741 = vand.u32 %v740, 127
        %vm742 = vcmp.lt.s32.totalorder %v741, 32
        %v743 = vsub.f32 %v734, %v739
        %v744 = vsel %vm742, %v743, 0.0
        %v745 = vmul.f32 %v744, %v744
        %746 = vadd.xlane.f32.xlu0 %v745
        %v747 = vpop.xlane.xlu0 %746
        %v748 = vmul.f32 %v747, 0.03125
        %v749 = vadd.f32 %v748, 1e-05
        %v750 = vrsqrt.pop %v749
        %v751 = vmul.f32 %v744, %v750
        %v753 = vlaneseq
        %v754 = vshrl.u32 %v753, 7
        %v755 = vsub.s32 0, %v754
        %v756 = vrot.slane %v735, %v755
        %v758 = vmul.f32 %v751, %v756
        %v760 = vlaneseq
        %v761 = vshrl.u32 %v760, 7
        %v762 = vsub.s32 0, %v761
        %v763 = vrot.slane %v736, %v762
        %v765 = vadd.f32 %v758, %v763
        %v766 = vld [vmem:[#allocation3] sm:$0xff]
        %v767 = vld [vmem:[#allocation3 + $0x8] sm:$0xff]
        %v768 = vld [vmem:[#allocation3 + $0x10] sm:$0xff]
        %v769 = vld [vmem:[#allocation3 + $0x18] sm:$0xff]
        %v770 = vld [vmem:[#allocation3 + $0x20] sm:$0xff]
        %v771 = vld [vmem:[#allocation3 + $0x28] sm:$0xff]
        %v772 = vld [vmem:[#allocation3 + $0x30] sm:$0xff]
        %v773 = vld [vmem:[#allocation3 + $0x38] sm:$0xff]
        %v774 = vld [vmem:[#allocation3 + $0x40] sm:$0xff]
        %v775 = vld [vmem:[#allocation3 + $0x48] sm:$0xff]
        %v776 = vld [vmem:[#allocation3 + $0x50] sm:$0xff]
        %v777 = vld [vmem:[#allocation3 + $0x58] sm:$0xff]
        %v778 = vld [vmem:[#allocation3 + $0x60] sm:$0xff]
        %v779 = vld [vmem:[#allocation3 + $0x68] sm:$0xff]
        %v780 = vld [vmem:[#allocation3 + $0x70] sm:$0xff]
        %v781 = vld [vmem:[#allocation3 + $0x78] sm:$0xff]
        %782 = vmatprep.subr.mxu0 0.0
        %783 = vmatpush1.msra.mxu0 %v766
        %784 = vmatprep.subr.mxu0 0.0
        %785 = vmatpush1.msra.mxu0 %v767
        %786 = vmatprep.subr.mxu0 0.0
        %787 = vmatpush1.msra.mxu0 %v768
        %788 = vmatprep.subr.mxu0 0.0
        %789 = vmatpush1.msra.mxu0 %v769
        %790 = vmatprep.subr.mxu0 0.0
        %791 = vmatpush1.msra.mxu0 %v770
        %792 = vmatprep.subr.mxu0 0.0
        %793 = vmatpush1.msra.mxu0 %v771
        %794 = vmatprep.subr.mxu0 0.0
        %795 = vmatpush1.msra.mxu0 %v772
        %796 = vmatprep.subr.mxu0 0.0
        %797 = vmatpush1.msra.mxu0 %v773
        %798 = vmatprep.subr.mxu0 0.0
        %799 = vmatpush1.msra.mxu0 %v774
        %800 = vmatprep.subr.mxu0 0.0
        %801 = vmatpush1.msra.mxu0 %v775
        %802 = vmatprep.subr.mxu0 0.0
        %803 = vmatpush1.msra.mxu0 %v776
        %804 = vmatprep.subr.mxu0 0.0
        %805 = vmatpush1.msra.mxu0 %v777
        %806 = vmatprep.subr.mxu0 0.0
        %807 = vmatpush1.msra.mxu0 %v778
        %808 = vmatprep.subr.mxu0 0.0
        %809 = vmatpush1.msra.mxu0 %v779
        %810 = vmatprep.subr.mxu0 0.0
        %811 = vmatpush1.msra.mxu0 %v780
        %812 = vmatprep.subr.mxu0 0.0
        %813 = vmatpush1.msra.mxu0 %v781
        %814 = vmatprep.subr.mxu0 0.0
        %815 = vmatpush1.msra.mxu0 0.0
        %816 = vmatprep.subr.mxu0 0.0
        %817 = vmatpush1.msra.mxu0 0.0
        %818 = vmatprep.subr.mxu0 0.0
        %819 = vmatpush1.msra.mxu0 0.0
        %820 = vmatprep.subr.mxu0 0.0
        %821 = vmatpush1.msra.mxu0 0.0
        %822 = vmatprep.subr.mxu0 0.0
        %823 = vmatpush1.msra.mxu0 0.0
        %824 = vmatprep.subr.mxu0 0.0
        %825 = vmatpush1.msra.mxu0 0.0
        %826 = vmatprep.subr.mxu0 0.0
        %827 = vmatpush1.msra.mxu0 0.0
        %828 = vmatprep.subr.mxu0 0.0
        %829 = vmatpush1.msra.mxu0 0.0
        %830 = vmatprep.subr.mxu0 0.0
        %831 = vmatpush1.msra.mxu0 0.0
        %832 = vmatprep.subr.mxu0 0.0
        %833 = vmatpush1.msra.mxu0 0.0
        %834 = vmatprep.subr.mxu0 0.0
        %835 = vmatpush1.msra.mxu0 0.0
        %836 = vmatprep.subr.mxu0 0.0
        %837 = vmatpush1.msra.mxu0 0.0
        %838 = vmatprep.subr.mxu0 0.0
        %839 = vmatpush1.msra.mxu0 0.0
        %840 = vmatprep.subr.mxu0 0.0
        %841 = vmatpush1.msra.mxu0 0.0
        %842 = vmatprep.subr.mxu0 0.0
        %843 = vmatpush1.msra.mxu0 0.0
        %844 = vmatprep.subr.mxu0 0.0
        %845 = vmatpush1.msra.mxu0 0.0
        %846 = vmatprep.mubr.f32.mxu0 0.0
        %847 = vmatmul.mubr.f32.gmra.mrb[0].mxu0 %v765
        %v848 = vpop.f32.mrb[0].mxu0
        %v849 = vadd.f32 0.0, %v848
        %v850 = vpop.f32.mrb[0].mxu0
        %851 = vdwg.mxu0
        %v852 = vld [vmem:[%s7] sm:$0x1]
        %v854 = vlaneseq
        %v855 = vshrl.u32 %v854, 7
        %v856 = vsub.s32 0, %v855
        %v857 = vrot.slane %v852, %v856
        %859 = vmatprep.subr.mxu0 0.0
        %860 = vmatpush1.msra.mxu0 %v849
        %861 = vmatprep.subr.mxu0 0.0
        %862 = vmatpush1.msra.mxu0 0.0
        %863 = vmatprep.subr.mxu0 0.0
        %864 = vmatpush1.msra.mxu0 0.0
        %865 = vmatprep.subr.mxu0 0.0
        %866 = vmatpush1.msra.mxu0 0.0
        %867 = vmatprep.subr.mxu0 0.0
        %868 = vmatpush1.msra.mxu0 0.0
        %869 = vmatprep.subr.mxu0 0.0
        %870 = vmatpush1.msra.mxu0 0.0
        %871 = vmatprep.subr.mxu0 0.0
        %872 = vmatpush1.msra.mxu0 0.0
        %873 = vmatprep.subr.mxu0 0.0
        %874 = vmatpush1.msra.mxu0 0.0
        %875 = vmatprep.subr.mxu0 0.0
        %876 = vmatpush1.msra.mxu0 0.0
        %877 = vmatprep.subr.mxu0 0.0
        %878 = vmatpush1.msra.mxu0 0.0
        %879 = vmatprep.subr.mxu0 0.0
        %880 = vmatpush1.msra.mxu0 0.0
        %881 = vmatprep.subr.mxu0 0.0
        %882 = vmatpush1.msra.mxu0 0.0
        %883 = vmatprep.subr.mxu0 0.0
        %884 = vmatpush1.msra.mxu0 0.0
        %885 = vmatprep.subr.mxu0 0.0
        %886 = vmatpush1.msra.mxu0 0.0
        %887 = vmatprep.subr.mxu0 0.0
        %888 = vmatpush1.msra.mxu0 0.0
        %889 = vmatprep.subr.mxu0 0.0
        %890 = vmatpush1.msra.mxu0 0.0
        %891 = vmatprep.subr.mxu0 0.0
        %892 = vmatpush1.msra.mxu0 0.0
        %893 = vmatprep.subr.mxu0 0.0
        %894 = vmatpush1.msra.mxu0 0.0
        %895 = vmatprep.subr.mxu0 0.0
        %896 = vmatpush1.msra.mxu0 0.0
        %897 = vmatprep.subr.mxu0 0.0
        %898 = vmatpush1.msra.mxu0 0.0
        %899 = vmatprep.subr.mxu0 0.0
        %900 = vmatpush1.msra.mxu0 0.0
        %901 = vmatprep.subr.mxu0 0.0
        %902 = vmatpush1.msra.mxu0 0.0
        %903 = vmatprep.subr.mxu0 0.0
        %904 = vmatpush1.msra.mxu0 0.0
        %905 = vmatprep.subr.mxu0 0.0
        %906 = vmatpush1.msra.mxu0 0.0
        %907 = vmatprep.subr.mxu0 0.0
        %908 = vmatpush1.msra.mxu0 0.0
        %909 = vmatprep.subr.mxu0 0.0
        %910 = vmatpush1.msra.mxu0 0.0
        %911 = vmatprep.subr.mxu0 0.0
        %912 = vmatpush1.msra.mxu0 0.0
        %913 = vmatprep.subr.mxu0 0.0
        %914 = vmatpush1.msra.mxu0 0.0
        %915 = vmatprep.subr.mxu0 0.0
        %916 = vmatpush1.msra.mxu0 0.0
        %917 = vmatprep.subr.mxu0 0.0
        %918 = vmatpush1.msra.mxu0 0.0
        %919 = vmatprep.subr.mxu0 0.0
        %920 = vmatpush1.msra.mxu0 0.0
        %921 = vmatprep.subr.mxu0 0.0
        %922 = vmatpush1.msra.mxu0 0.0
        %923 = vmatprep.mubr.f32.mxu0 0.0
        %924 = vmatmul.mubr.f32.gmra.mrb[0].mxu0 %v662
        %v925 = vpop.f32.mrb[0].mxu0
        %v926 = vadd.f32 %v857, %v925
        %v927 = vpop.f32.mrb[0].mxu0
        %928 = vdwg.mxu0
        %v929 = vmax.f32 %v926, 0.0
        %v930 = vrot.slane %v929, 4
        %v931 = vadd.f32 %v929, %v930
        %v932 = vrot.slane %v931, 2
        %v933 = vadd.f32 %v931, %v932
        %v934 = vrot.slane %v933, 1
        %v935 = vadd.f32 %v933, %v934
        %v936 = vrcp.pop 8.0
        %v937 = vmul.f32 %v935, %v936
        %v938 = vld [vmem:[%s8] sm:$0x1]
        %v939 = vld [vmem:[%s9] sm:$0x1]
        %940 = vadd.xlane.f32.xlu0 %v937
        %v941 = vpop.xlane.xlu0 %940
        %v942 = vmul.f32 %v941, 0.03125
        %v943 = vsub.f32 %v937, %v942
        %v944 = vsel %vm742, %v943, 0.0
        %v945 = vmul.f32 %v944, %v944
        %946 = vadd.xlane.f32.xlu0 %v945
        %v947 = vpop.xlane.xlu0 %946
        %v948 = vmul.f32 %v947, 0.03125
        %v949 = vadd.f32 %v948, 1e-05
        %v950 = vrsqrt.pop %v949
        %v951 = vmul.f32 %v944, %v950
        %v952 = vmul.f32 %v951, %v938
        %v953 = vadd.f32 %v952, %v939
        %v954 = vld [vmem:[#allocation5] sm:$0xff]
        %v955 = vld [vmem:[#allocation5 + $0x8] sm:$0xff]
        %v956 = vld [vmem:[#allocation5 + $0x10] sm:$0xff]
        %v957 = vld [vmem:[#allocation5 + $0x18] sm:$0xff]
        %v958 = vld [vmem:[#allocation5 + $0x20] sm:$0xff]
        %v959 = vld [vmem:[#allocation5 + $0x28] sm:$0xff]
        %v960 = vld [vmem:[#allocation5 + $0x30] sm:$0xff]
        %v961 = vld [vmem:[#allocation5 + $0x38] sm:$0xff]
        %v962 = vld [vmem:[#allocation5 + $0x40] sm:$0xff]
        %v963 = vld [vmem:[#allocation5 + $0x48] sm:$0xff]
        %v964 = vld [vmem:[#allocation5 + $0x50] sm:$0xff]
        %v965 = vld [vmem:[#allocation5 + $0x58] sm:$0xff]
        %v966 = vld [vmem:[#allocation5 + $0x60] sm:$0xff]
        %v967 = vld [vmem:[#allocation5 + $0x68] sm:$0xff]
        %v968 = vld [vmem:[#allocation5 + $0x70] sm:$0xff]
        %v969 = vld [vmem:[#allocation5 + $0x78] sm:$0xff]
        %v970 = vld [vmem:[%s11] sm:$0x1]
        %971 = vmatprep.subr.mxu0 0.0
        %972 = vmatpush1.msra.mxu0 %v954
        %973 = vmatprep.subr.mxu0 0.0
        %974 = vmatpush1.msra.mxu0 %v955
        %975 = vmatprep.subr.mxu0 0.0
        %976 = vmatpush1.msra.mxu0 %v956
        %977 = vmatprep.subr.mxu0 0.0
        %978 = vmatpush1.msra.mxu0 %v957
        %979 = vmatprep.subr.mxu0 0.0
        %980 = vmatpush1.msra.mxu0 %v958
        %981 = vmatprep.subr.mxu0 0.0
        %982 = vmatpush1.msra.mxu0 %v959
        %983 = vmatprep.subr.mxu0 0.0
        %984 = vmatpush1.msra.mxu0 %v960
        %985 = vmatprep.subr.mxu0 0.0
        %986 = vmatpush1.msra.mxu0 %v961
        %987 = vmatprep.subr.mxu0 0.0
        %988 = vmatpush1.msra.mxu0 %v962
        %989 = vmatprep.subr.mxu0 0.0
        %990 = vmatpush1.msra.mxu0 %v963
        %991 = vmatprep.subr.mxu0 0.0
        %992 = vmatpush1.msra.mxu0 %v964
        %993 = vmatprep.subr.mxu0 0.0
        %994 = vmatpush1.msra.mxu0 %v965
        %995 = vmatprep.subr.mxu0 0.0
        %996 = vmatpush1.msra.mxu0 %v966
        %997 = vmatprep.subr.mxu0 0.0
        %998 = vmatpush1.msra.mxu0 %v967
        %999 = vmatprep.subr.mxu0 0.0
        %1000 = vmatpush1.msra.mxu0 %v968
        %1001 = vmatprep.subr.mxu0 0.0
        %1002 = vmatpush1.msra.mxu0 %v969
        %1003 = vmatprep.subr.mxu0 0.0
        %1004 = vmatpush1.msra.mxu0 0.0
        %1005 = vmatprep.subr.mxu0 0.0
        %1006 = vmatpush1.msra.mxu0 0.0
        %1007 = vmatprep.subr.mxu0 0.0
        %1008 = vmatpush1.msra.mxu0 0.0
        %1009 = vmatprep.subr.mxu0 0.0
        %1010 = vmatpush1.msra.mxu0 0.0
        %1011 = vmatprep.subr.mxu0 0.0
        %1012 = vmatpush1.msra.mxu0 0.0
        %1013 = vmatprep.subr.mxu0 0.0
        %1014 = vmatpush1.msra.mxu0 0.0
        %1015 = vmatprep.subr.mxu0 0.0
        %1016 = vmatpush1.msra.mxu0 0.0
        %1017 = vmatprep.subr.mxu0 0.0
        %1018 = vmatpush1.msra.mxu0 0.0
        %1019 = vmatprep.subr.mxu0 0.0
        %1020 = vmatpush1.msra.mxu0 0.0
        %1021 = vmatprep.subr.mxu0 0.0
        %1022 = vmatpush1.msra.mxu0 0.0
        %1023 = vmatprep.subr.mxu0 0.0
        %1024 = vmatpush1.msra.mxu0 0.0
        %1025 = vmatprep.subr.mxu0 0.0
        %1026 = vmatpush1.msra.mxu0 0.0
        %1027 = vmatprep.subr.mxu0 0.0
        %1028 = vmatpush1.msra.mxu0 0.0
        %1029 = vmatprep.subr.mxu0 0.0
        %1030 = vmatpush1.msra.mxu0 0.0
        %1031 = vmatprep.subr.mxu0 0.0
        %1032 = vmatpush1.msra.mxu0 0.0
        %1033 = vmatprep.subr.mxu0 0.0
        %1034 = vmatpush1.msra.mxu0 0.0
        %1035 = vmatprep.mubr.f32.mxu0 0.0
        %1036 = vmatmul.mubr.f32.gmra.mrb[0].mxu0 %v953
        %v1037 = vpop.f32.mrb[0].mxu0
        %v1038 = vadd.f32 %v970, %v1037
        %v1039 = vpop.f32.mrb[0].mxu0
        %1040 = vdwg.mxu0
        %v1041 = vmax.f32 %v1038, 0.0
        %v1042 = vld [vmem:[%s12] sm:$0x1]
        %v1043 = vld [vmem:[%s13] sm:$0x1]
        %vm1044 = vcmask 1040384
        %v1045 = vsel %vm1044, %v1041, 0.0
        %1046 = vadd.xlane.f32.xlu0 %v1045
        %v1047 = vpop.xlane.xlu0 %1046
        %v1048 = vmul.f32 %v1047, 0.03125
        %v1049 = vsub.f32 %v1041, %v1048
        %v1050 = vsel %vm742, %v1049, 0.0
        %v1051 = vmul.f32 %v1050, %v1050
        %v1052 = vsel %vm1044, %v1051, 0.0
        %1053 = vadd.xlane.f32.xlu0 %v1052
        %v1054 = vpop.xlane.xlu0 %1053
        %v1055 = vmul.f32 %v1054, 0.03125
        %v1056 = vadd.f32 %v1055, 1e-05
        %v1057 = vrsqrt.pop %v1056
        %v1058 = vmul.f32 %v1050, %v1057
        %v1059 = vmul.f32 %v1058, %v1042
        %v1060 = vadd.f32 %v1059, %v1043
        %v1061 = vld [vmem:[%s14] sm:$0xff]
        %v1062 = vld [vmem:[%s14 + $0x8] sm:$0xff]
        %v1063 = vld [vmem:[%s14 + $0x10] sm:$0xff]
        %v1064 = vld [vmem:[%s14 + $0x18] sm:$0xff]
        %v1065 = vld [vmem:[%s14 + $0x20] sm:$0xff]
        %v1066 = vld [vmem:[%s14 + $0x28] sm:$0xff]
        %v1067 = vld [vmem:[%s14 + $0x30] sm:$0xff]
        %v1068 = vld [vmem:[%s14 + $0x38] sm:$0xff]
        %v1069 = vld [vmem:[%s14 + $0x40] sm:$0xff]
        %v1070 = vld [vmem:[%s14 + $0x48] sm:$0xff]
        %v1071 = vld [vmem:[%s14 + $0x50] sm:$0xff]
        %v1072 = vld [vmem:[%s14 + $0x58] sm:$0xff]
        %v1073 = vld [vmem:[%s14 + $0x60] sm:$0xff]
        %v1074 = vld [vmem:[%s14 + $0x68] sm:$0xff]
        %v1075 = vld [vmem:[%s14 + $0x70] sm:$0xff]
        %v1076 = vld [vmem:[%s14 + $0x78] sm:$0xff]
        %v1077 = vld [vmem:[#allocation2] sm:$0x1]
        %1078 = vmatprep.subr.mxu0 0.0
        %1079 = vmatpush1.msra.mxu0 %v1061
        %1080 = vmatprep.subr.mxu0 0.0
        %1081 = vmatpush1.msra.mxu0 %v1062
        %1082 = vmatprep.subr.mxu0 0.0
        %1083 = vmatpush1.msra.mxu0 %v1063
        %1084 = vmatprep.subr.mxu0 0.0
        %1085 = vmatpush1.msra.mxu0 %v1064
        %1086 = vmatprep.subr.mxu0 0.0
        %1087 = vmatpush1.msra.mxu0 %v1065
        %1088 = vmatprep.subr.mxu0 0.0
        %1089 = vmatpush1.msra.mxu0 %v1066
        %1090 = vmatprep.subr.mxu0 0.0
        %1091 = vmatpush1.msra.mxu0 %v1067
        %1092 = vmatprep.subr.mxu0 0.0
        %1093 = vmatpush1.msra.mxu0 %v1068
        %1094 = vmatprep.subr.mxu0 0.0
        %1095 = vmatpush1.msra.mxu0 %v1069
        %1096 = vmatprep.subr.mxu0 0.0
        %1097 = vmatpush1.msra.mxu0 %v1070
        %1098 = vmatprep.subr.mxu0 0.0
        %1099 = vmatpush1.msra.mxu0 %v1071
        %1100 = vmatprep.subr.mxu0 0.0
        %1101 = vmatpush1.msra.mxu0 %v1072
        %1102 = vmatprep.subr.mxu0 0.0
        %1103 = vmatpush1.msra.mxu0 %v1073
        %1104 = vmatprep.subr.mxu0 0.0
        %1105 = vmatpush1.msra.mxu0 %v1074
        %1106 = vmatprep.subr.mxu0 0.0
        %1107 = vmatpush1.msra.mxu0 %v1075
        %1108 = vmatprep.subr.mxu0 0.0
        %1109 = vmatpush1.msra.mxu0 %v1076
        %1110 = vmatprep.subr.mxu0 0.0
        %1111 = vmatpush1.msra.mxu0 0.0
        %1112 = vmatprep.subr.mxu0 0.0
        %1113 = vmatpush1.msra.mxu0 0.0
        %1114 = vmatprep.subr.mxu0 0.0
        %1115 = vmatpush1.msra.mxu0 0.0
        %1116 = vmatprep.subr.mxu0 0.0
        %1117 = vmatpush1.msra.mxu0 0.0
        %1118 = vmatprep.subr.mxu0 0.0
        %1119 = vmatpush1.msra.mxu0 0.0
        %1120 = vmatprep.subr.mxu0 0.0
        %1121 = vmatpush1.msra.mxu0 0.0
        %1122 = vmatprep.subr.mxu0 0.0
        %1123 = vmatpush1.msra.mxu0 0.0
        %1124 = vmatprep.subr.mxu0 0.0
        %1125 = vmatpush1.msra.mxu0 0.0
        %1126 = vmatprep.subr.mxu0 0.0
        %1127 = vmatpush1.msra.mxu0 0.0
        %1128 = vmatprep.subr.mxu0 0.0
        %1129 = vmatpush1.msra.mxu0 0.0
        %1130 = vmatprep.subr.mxu0 0.0
        %1131 = vmatpush1.msra.mxu0 0.0
        %1132 = vmatprep.subr.mxu0 0.0
        %1133 = vmatpush1.msra.mxu0 0.0
        %1134 = vmatprep.subr.mxu0 0.0
        %1135 = vmatpush1.msra.mxu0 0.0
        %1136 = vmatprep.subr.mxu0 0.0
        %1137 = vmatpush1.msra.mxu0 0.0
        %1138 = vmatprep.subr.mxu0 0.0
        %1139 = vmatpush1.msra.mxu0 0.0
        %1140 = vmatprep.subr.mxu0 0.0
        %1141 = vmatpush1.msra.mxu0 0.0
        %1142 = vmatprep.mubr.f32.mxu0 0.0
        %1143 = vmatmul.mubr.f32.gmra.mrb[0].mxu0 %v1060
        %v1144 = vpop.f32.mrb[0].mxu0
        %v1145 = vadd.f32 %v1077, %v1144
        %v1146 = vpop.f32.mrb[0].mxu0
        %1147 = vdwg.mxu0
        %vm1148 = vcmask 0
        %1149 = vst.msk [vmem:[%s563] sm:$0x1] %vm1148, %v1145
        %p1150 = scmp.lt.s32.totalorder %s31, 1
        %s1151 = scalar_select %p1150, %s31, 1
        %s1152 = scalar_lea.vmem %s16, %s1151
        // Predicated region
        $region93: #{affinity_net_forward.1} parent=83 // pred_check
          %p1153 = pneg %p395
        $region94: #{affinity_net_forward.1} parent=83 // pred_check_branch
          %1155 = sbr.rel (%p1153) target = $region96
        $region95: #{affinity_net_forward.1} parent=83 // pred_region
          _
        $region96: #{affinity_net_forward.1} parent=83 // pred_fallthru
          _
      $region84: #{affinity_net_forward.1} parent=5 // pred_fallthru
        _
      %p1156 = scmp.le.s32.totalorder 2, %s26
      // Predicated region
      $region97: #{affinity_net_forward.1} parent=5 // pred_check
        %p1157 = pneg %p1156
      $region98: #{affinity_net_forward.1} parent=5 // pred_check_branch
        %1159 = sbr.rel (%p1157) target = $region100
      $region99: #{affinity_net_forward.1} parent=5 // pred_region
        %s1160 = ssub.s32 %s26, 2
        // Predicated region
        $region101: #{affinity_net_forward.1} parent=99 // pred_check
          %p1161 = pneg %p401
        $region102: #{affinity_net_forward.1} parent=99 // pred_check_branch
          %1163 = sbr.rel (%p1161) target = $region104
        $region103: #{affinity_net_forward.1} parent=99 // pred_region
          %p1164 = scmp.lt.s32.totalorder %s32, 1
          %s1165 = scalar_select %p1164, %s32, 1
          %s1166 = scalar_lea.vmem %s16, %s1165
        $region104: #{affinity_net_forward.1} parent=99 // pred_fallthru
          _
      $region100: #{affinity_net_forward.1} parent=5 // pred_fallthru
        _
    $region6: #{affinity_net_forward.1} parent=1 // loop_footer
      %s30 = sadd.s32 1, %s26
    $region7: #{affinity_net_forward.1} parent=1 // loop_footer_branch
      %25 = sbr.rel target = $region3
    $region8: #{affinity_net_forward.1} parent=1 // loop_exit
      _
    %1167 = vsyncpa [#allocation4], 1
    %s1168 = scalar_lea.sflag [#allocation4], 1
    %1169 = vsyncpa %s1168, 1
    %1170 = vsyncpa [#allocation6], 1

</llo_original>
